<compile_context>
chip_gen: v6e
topology: v6e:2x2x1
jax: 0.10.0
libtpu: 0.0.40
codegen_flags: <defaults>
</compile_context>

<pallas_src>
import functools

import jax
import jax.numpy as jnp
from jax.experimental import pallas as pl
from jax.experimental.pallas import tpu as pltpu


def _round_up(x, m):
    return ((x + m - 1) // m) * m


def _vmem_budget_bytes():
    """~75% of physical VMEM (v5e/v6e: 128 MiB -> 96 MiB, v7x: 64 MiB -> 48 MiB)."""
    cap = 64 * 1024 * 1024  # conservative (v7x-sized) fallback
    try:
        info = pltpu.get_tpu_info()
        cap = int(getattr(info, "vmem_capacity_bytes", cap) or cap)
    except Exception:
        pass
    return (cap * 3) // 4


def _choose_tiling(n):
    """Pick (n_pad, tm, tk).

    N is padded to the row tile (not to 128) so the tile can't collapse for
    awkward N; tiles are multiples of 256 (full 256x256 MXU passes on v6e/v7x)
    and graphs larger than one tile get a >=2 (usually even) row grid so the
    'parallel' axis can be sharded across v7x's two TensorCores.
    """
    if n <= 256:
        n_pad, tm = 256, 256
    elif n <= 1024:
        n_pad, tm = _round_up(n, 256), 256
    else:
        n_pad, tm = _round_up(n, 512), 512
    # Largest 256-multiple K tile that divides n_pad, capped at 2048.
    tk = 256
    for cand in range(min(2048, n_pad), 255, -256):
        if n_pad % cand == 0:
            tk = cand
            break
    return n_pad, tm, tk


# --------------------------------------------------------------------------- #
# Pallas kernel: out = epilogue( A_hat @ XW )                                  #
#   grid = (rows // TM  [parallel],  A-columns // TK  [arbitrary, reduction])  #
#   acc_ref: VMEM (TM, F_pad) f32 accumulator resident across the k axis       #
#            (kept f32 even when the HBM output is bf16).                      #
#   Epilogue (fused bias+BN scale/shift, optional ReLU) only at the last k.    #
#   xw_ref is either the full VMEM-resident (N_pad, F_pad) array (sliced with  #
#   pl.ds) or a (TK, F_pad) tile, chosen by a VMEM-budget gate in the wrapper. #
# --------------------------------------------------------------------------- #
def gcn_spmm_kernel(a_ref, xw_ref, scale_ref, shift_ref, o_ref, acc_ref, *,
                    tk, apply_relu, xw_resident):
    k = pl.program_id(1)

    @pl.when(k == 0)
    def _init():
        acc_ref[...] = jnp.zeros_like(acc_ref)

    if xw_resident:
        # XW was DMA'd once (constant index_map) and stays in VMEM; slice the
        # current K window in-kernel.
        k0 = pl.multiple_of(k * tk, 256)
        xw = xw_ref[pl.ds(k0, tk), :]
    else:
        xw = xw_ref[...]

    acc_ref[...] += jnp.dot(a_ref[...], xw, preferred_element_type=jnp.float32)

    @pl.when(k == pl.num_programs(1) - 1)
    def _epilogue():
        h = acc_ref[...] * scale_ref[...] + shift_ref[...]
        if apply_relu:
            h = jnp.maximum(h, 0.0)
        o_ref[...] = h.astype(o_ref.dtype)


def gcn_spmm(a_pad, xw_pad, scale, shift, *, tm, tk, apply_relu, out_dtype,
             vmem_budget):
    n_pad = a_pad.shape[0]
    f_pad = xw_pad.shape[1]
    grid = (n_pad // tm, n_pad // tk)

    a_isz = jnp.dtype(a_pad.dtype).itemsize
    xw_isz = jnp.dtype(xw_pad.dtype).itemsize
    out_isz = jnp.dtype(out_dtype).itemsize

    # Conservative VMEM estimate (double-buffered inputs/outputs + f32 scratch).
    base_bytes = (2 * tm * tk * a_isz          # A tile (double buffered)
                  + 2 * tm * f_pad * out_isz   # output tile
                  + tm * f_pad * 4             # f32 accumulator scratch
                  + 4 * f_pad * 4)             # scale/shift
    xw_resident = (base_bytes + 2 * n_pad * f_pad * xw_isz
                   <= vmem_budget - (4 << 20))

    if xw_resident:
        # Full array, constant block index -> DMA'd once, VMEM-resident for the
        # whole grid (eliminates the grid[0]-fold XW re-read).
        xw_spec = pl.BlockSpec((n_pad, f_pad), lambda i, k: (0, 0))
        xw_bytes = n_pad * f_pad * xw_isz
    else:
        xw_spec = pl.BlockSpec((tk, f_pad), lambda i, k: (k, 0))
        xw_bytes = grid[0] * n_pad * f_pad * xw_isz

    kernel = functools.partial(gcn_spmm_kernel, tk=tk, apply_relu=apply_relu,
                               xw_resident=xw_resident)
    cost = pl.CostEstimate(
        flops=2 * n_pad * n_pad * f_pad,
        transcendentals=0,
        bytes_accessed=(n_pad * n_pad * a_isz          # A streamed once
                        + xw_bytes                     # XW (once if resident)
                        + n_pad * f_pad * out_isz),    # output written once
    )

    return pl.pallas_call(
        kernel,
        out_shape=jax.ShapeDtypeStruct((n_pad, f_pad), out_dtype),
        grid_spec=pltpu.PrefetchScalarGridSpec(
            num_scalar_prefetch=0,
            grid=grid,
            in_specs=[
                pl.BlockSpec((tm, tk), lambda i, k: (i, k)),     # A_hat tile
                xw_spec,                                         # XW (resident or tiled)
                pl.BlockSpec((1, f_pad), lambda i, k: (0, 0)),   # fused scale
                pl.BlockSpec((1, f_pad), lambda i, k: (0, 0)),   # fused shift
            ],
            out_specs=pl.BlockSpec((tm, f_pad), lambda i, k: (i, 0)),
            scratch_shapes=[pltpu.VMEM((tm, f_pad), jnp.float32)],
        ),
        compiler_params=pltpu.CompilerParams(
            dimension_semantics=("parallel", "arbitrary"),
            vmem_limit_bytes=int(vmem_budget),
        ),
        cost_estimate=cost,
    )(a_pad, xw_pad, scale, shift)


def build_normalized_adjacency(edge_index, num_nodes):
    """Dense D^{-1/2}(A + I)D^{-1/2} from edge_index [2, E] (src, dst). Plain-JAX glue."""
    # TODO(synk): dense O(N^2) adjacency; for large sparse graphs replace with a
    # gather/scalar-prefetch SpMM (CSR pointers in SMEM + manual make_async_copy
    # row gathers) so traffic is O(E * F_out) instead of O(N^2).
    src, dst = edge_index[0], edge_index[1]
    a = jnp.zeros((num_nodes, num_nodes), jnp.float32).at[dst, src].add(1.0)
    # add_remaining_self_loops: only nodes without an existing self-loop get one.
    diag = jnp.diagonal(a)
    a = a + jnp.diag(jnp.where(diag > 0.0, 0.0, 1.0))
    deg = jnp.sum(a, axis=1)
    d_inv_sqrt = jax.lax.rsqrt(deg)          # deg >= 1 thanks to self loops
    return d_inv_sqrt[:, None] * a * d_inv_sqrt[None, :]


def graph_feature_encoder(x, edge_index, params, apply_bn=True,
                          compute_dtype=jnp.bfloat16):
    """Eval-mode forward of GraphFeatureEncoder (GCNConv stack)."""
    n = x.shape[0]
    eps = 1e-5
    n_pad, tm, tk = _choose_tiling(n)
    vmem_budget = _vmem_budget_bytes()

    a_hat = build_normalized_adjacency(edge_index, n)
    # TODO(synk): on v7x the A_hat stream (values in (0,1]) could be quantized to
    # fp8 e4m3 for the fp8 MXU; kept bf16/f32 pending numerical validation.
    a_pad = jnp.zeros((n_pad, n_pad), compute_dtype).at[:n, :n].set(
        a_hat.astype(compute_dtype))

    num_layers = len(params)
    # Keep h row-padded to n_pad through all layers so XW comes out of the XLA
    # dot already padded (no zeros().at[].set() round trip per layer).  Padded
    # rows/cols never contaminate valid rows (A_hat pad columns are zero).
    h = jnp.zeros((n_pad, x.shape[1]), jnp.float32).at[:n].set(x.astype(jnp.float32))
    f_out = x.shape[1]
    for li, p in enumerate(params):
        is_final = li == num_layers - 1
        f_in, f_out = p["w"].shape
        f_pad = _round_up(f_out, 128)

        # Fold conv bias (and eval-mode BN) into a single scale/shift epilogue.
        if (not is_final) and apply_bn:
            s = p["bn_gamma"] / jnp.sqrt(p["bn_var"] + eps)
            scale = s
            shift = p["bn_beta"] - p["bn_mean"] * s + p["b"] * s
        else:
            scale = jnp.ones((f_out,), jnp.float32)
            shift = p["b"]

        # Lane-pad channels to 128 so output stores are lane-dense / unmasked.
        w_pad = jnp.zeros((h.shape[1], f_pad), jnp.float32).at[:f_in, :f_out].set(p["w"])
        scale_pad = jnp.ones((1, f_pad), jnp.float32).at[0, :f_out].set(scale)
        shift_pad = jnp.zeros((1, f_pad), jnp.float32).at[0, :f_out].set(shift)

        # Tiny dense X @ W in f32 (XLA), then feed the HBM-heavy A_hat @ (XW)
        # to the tiled Pallas kernel in compute_dtype with f32 accumulation.
        xw = jnp.dot(h.astype(jnp.float32), w_pad,
                     preferred_element_type=jnp.float32).astype(compute_dtype)

        out_dtype = jnp.float32 if is_final else compute_dtype
        h = gcn_spmm(a_pad, xw, scale_pad, shift_pad, tm=tm, tk=tk,
                     apply_relu=not is_final, out_dtype=out_dtype,
                     vmem_budget=vmem_budget)
    return h[:n, :f_out]


def init_params(key, in_features, conv_channels):
    params = []
    dims = [in_features] + list(conv_channels)
    num_layers = len(conv_channels)
    for li in range(num_layers):
        f_in, f_out = dims[li], dims[li + 1]
        key, kw, kb, km, kv, kg, kbt = jax.random.split(key, 7)
        p = {
            "w": jax.random.normal(kw, (f_in, f_out), jnp.float32)
                 * (1.0 / jnp.sqrt(jnp.float32(f_in))),
            "b": jax.random.normal(kb, (f_out,), jnp.float32) * 0.1,
        }
        if li < num_layers - 1:  # BN only on non-final layers
            p["bn_mean"] = jax.random.normal(km, (f_out,), jnp.float32) * 0.1
            p["bn_var"] = jax.random.uniform(kv, (f_out,), jnp.float32, 0.5, 1.5)
            p["bn_gamma"] = jax.random.uniform(kg, (f_out,), jnp.float32, 0.8, 1.2)
            p["bn_beta"] = jax.random.normal(kbt, (f_out,), jnp.float32) * 0.1
        params.append(p)
    return params


def reference_forward(x, edge_index, params, apply_bn=True):
    """Pure-JAX f32 reference of the same forward (for a sanity check)."""
    a_hat = build_normalized_adjacency(edge_index, x.shape[0])
    eps = 1e-5
    n_layers = len(params)
    for li, p in enumerate(params):
        h = a_hat @ (x @ p["w"]) + p["b"][None, :]
        if li < n_layers - 1:
            if apply_bn:
                h = (p["bn_gamma"] * (h - p["bn_mean"])
                     / jnp.sqrt(p["bn_var"] + eps) + p["bn_beta"])
            h = jnp.maximum(h, 0.0)
        x = h
    return x


if __name__ == "__main__":
    # TODO(synk): dropout_edge (training-only stochastic edge drop) and training-mode
    # BatchNorm batch statistics are not implemented; eval-mode semantics are used.
    key = jax.random.PRNGKey(0)
    num_nodes, in_features = 16, 8
    conv_channels = [32, 32, 16]
    num_edges = 40

    k_x, k_src, k_dst, k_p = jax.random.split(key, 4)
    x = jax.random.normal(k_x, (num_nodes, in_features), jnp.float32)
    src = jax.random.randint(k_src, (num_edges,), 0, num_nodes)
    # avoid accidental self-loops so (A + I) matches PyG's add_remaining_self_loops
    dst = (src + 1 + jax.random.randint(k_dst, (num_edges,), 0, num_nodes - 1)) % num_nodes
    edge_index = jnp.stack([src, dst]).astype(jnp.int32)

    params = init_params(k_p, in_features, conv_channels)

    # bf16 fast path (default)
    enc_bf16 = jax.jit(functools.partial(graph_feature_encoder, apply_bn=True))
    out = jax.block_until_ready(enc_bf16(x, edge_index, params))

    # f32 path (same kernel, tighter check)
    enc_f32 = jax.jit(functools.partial(graph_feature_encoder, apply_bn=True,
                                        compute_dtype=jnp.float32))
    out_f32 = jax.block_until_ready(enc_f32(x, edge_index, params))

    ref = reference_forward(x, edge_index, params, apply_bn=True)
    assert out.shape == (num_nodes, conv_channels[-1])
    assert jnp.allclose(out_f32, ref, rtol=2e-2, atol=2e-2)
    assert jnp.allclose(out, ref, rtol=5e-2, atol=5e-2)

    print("KERNEL_OK")
</pallas_src>

<mosaic_0001>
module attributes {stable_mosaic.version = 11 : i64} {
  func.func private @main(%arg0: i32) attributes {dimension_semantics = [#tpu.dimension_semantics<core_parallel>], iteration_bounds = array<i64: 2>, tpu.core_type = #tpu.core_type<sc_scalar_subcore>, window_params = []} {
    return
  }
}

module attributes {stable_mosaic.version = 11 : i64} {
  func.func private @main(%arg0: i32) attributes {dimension_semantics = [#tpu.dimension_semantics<core_parallel>], iteration_bounds = array<i64: 2>, tpu.core_type = #tpu.core_type<sc_scalar_subcore>, window_params = []} {
    return
  }
}

module attributes {stable_mosaic.version = 11 : i64} {
  func.func @gcn_spmm_kernel(%arg0: i32, %arg1: i32, %arg2: memref<256x256xbf16, #tpu.memory_space<vmem>>, %arg3: memref<256x128xbf16, #tpu.memory_space<vmem>>, %arg4: memref<1x128xf32, #tpu.memory_space<vmem>>, %arg5: memref<1x128xf32, #tpu.memory_space<vmem>>, %arg6: memref<256x128xbf16, #tpu.memory_space<vmem>>, %arg7: memref<256x128xf32, #tpu.memory_space<vmem>>) attributes {dimension_semantics = [#tpu.dimension_semantics<parallel>, #tpu.dimension_semantics<arbitrary>], iteration_bounds = array<i64: 1, 1>, scalar_prefetch = 0 : i64, scratch_operands = 1 : i64, tpu.core_type = #tpu.core_type<tc>, window_params = [{transform_indices = @transform_0, window_bounds = array<i64: 256, 256>}, {pipeline_mode = #tpu.pipeline_mode<synchronous>, transform_indices = @transform_1, window_bounds = array<i64: 256, 128>}, {pipeline_mode = #tpu.pipeline_mode<synchronous>, transform_indices = @transform_2, window_bounds = array<i64: 1, 128>}, {pipeline_mode = #tpu.pipeline_mode<synchronous>, transform_indices = @transform_3, window_bounds = array<i64: 1, 128>}, {transform_indices = @transform_4, window_bounds = array<i64: 256, 128>}]} {
    %c0_i32 = arith.constant 0 : i32
    %0 = arith.cmpi eq, %arg1, %c0_i32 : i32
    %1 = arith.extui %0 : i1 to i32
    %c0_i32_0 = arith.constant 0 : i32
    %2 = arith.cmpi ne, %1, %c0_i32_0 : i32
    scf.if %2 {
      %cst_9 = arith.constant 0.000000e+00 : f32
      %15 = vector.broadcast %cst_9 : f32 to vector<256x128xf32>
      %c0_10 = arith.constant 0 : index
      %c0_11 = arith.constant 0 : index
      %16 = vector.load %arg7[%c0_10, %c0_11] : memref<256x128xf32, #tpu.memory_space<vmem>>, vector<256x128xf32>
      tpu.vector_store %arg7[%c0_10, %c0_11], %15 {strides = array<i32>} : memref<256x128xf32, #tpu.memory_space<vmem>>, vector<256x128xf32>,
    } else {
    }
    %c256_i32 = arith.constant 256 : i32
    %3 = arith.muli %arg1, %c256_i32 : i32
    %4 = tpu.assume_multiple %3, 256 : i32
    %5 = arith.index_cast %4 : i32 to index
    %c0 = arith.constant 0 : index
    %6 = vector.load %arg3[%5, %c0] : memref<256x128xbf16, #tpu.memory_space<vmem>>, vector<256x128xbf16>
    %c0_1 = arith.constant 0 : index
    %c0_2 = arith.constant 0 : index
    %7 = vector.load %arg7[%c0_1, %c0_2] : memref<256x128xf32, #tpu.memory_space<vmem>>, vector<256x128xf32>
    %c0_3 = arith.constant 0 : index
    %c0_4 = arith.constant 0 : index
    %8 = vector.load %arg2[%c0_3, %c0_4] : memref<256x256xbf16, #tpu.memory_space<vmem>>, vector<256x256xbf16>
    %cst = arith.constant dense<0.000000e+00> : vector<256x128xf32>
    %9 = tpu.matmul %8, %6, %cst {dimension_numbers = #tpu.dot_dimension_numbers<[1], [0], [0], [1], [0, 0, 1, 1], [], []>} : vector<256x256xbf16>, vector<256x128xbf16>, vector<256x128xf32> -> vector<256x128xf32>
    %10 = arith.addf %7, %9 : vector<256x128xf32>
    %c0_5 = arith.constant 0 : index
    %c0_6 = arith.constant 0 : index
    %11 = vector.load %arg7[%c0_5, %c0_6] : memref<256x128xf32, #tpu.memory_space<vmem>>, vector<256x128xf32>
    tpu.vector_store %arg7[%c0_5, %c0_6], %10 {strides = array<i32>} : memref<256x128xf32, #tpu.memory_space<vmem>>, vector<256x128xf32>,
    %c0_i32_7 = arith.constant 0 : i32
    %12 = arith.cmpi eq, %arg1, %c0_i32_7 : i32
    %13 = arith.extui %12 : i1 to i32
    %c0_i32_8 = arith.constant 0 : i32
    %14 = arith.cmpi ne, %13, %c0_i32_8 : i32
    scf.if %14 {
      %c0_9 = arith.constant 0 : index
      %c0_10 = arith.constant 0 : index
      %15 = vector.load %arg7[%c0_9, %c0_10] : memref<256x128xf32, #tpu.memory_space<vmem>>, vector<256x128xf32>
      %c0_11 = arith.constant 0 : index
      %c0_12 = arith.constant 0 : index
      %16 = vector.load %arg4[%c0_11, %c0_12] : memref<1x128xf32, #tpu.memory_space<vmem>>, vector<1x128xf32>
      %17 = vector.broadcast %16 : vector<1x128xf32> to vector<256x128xf32>
      %18 = arith.mulf %15, %17 : vector<256x128xf32>
      %c0_13 = arith.constant 0 : index
      %c0_14 = arith.constant 0 : index
      %19 = vector.load %arg5[%c0_13, %c0_14] : memref<1x128xf32, #tpu.memory_space<vmem>>, vector<1x128xf32>
      %20 = vector.broadcast %19 : vector<1x128xf32> to vector<256x128xf32>
      %21 = arith.addf %18, %20 : vector<256x128xf32>
      %cst_15 = arith.constant 0.000000e+00 : f32
      %22 = vector.broadcast %cst_15 : f32 to vector<256x128xf32>
      %23 = arith.maximumf %21, %22 : vector<256x128xf32>
      %24 = arith.truncf %23 : vector<256x128xf32> to vector<256x128xbf16>
      %c0_16 = arith.constant 0 : index
      %c0_17 = arith.constant 0 : index
      %25 = vector.load %arg6[%c0_16, %c0_17] : memref<256x128xbf16, #tpu.memory_space<vmem>>, vector<256x128xbf16>
      tpu.vector_store %arg6[%c0_16, %c0_17], %24 {strides = array<i32>} : memref<256x128xbf16, #tpu.memory_space<vmem>>, vector<256x128xbf16>,
    } else {
    }
    return
  }
  func.func @transform_0(%arg0: i32, %arg1: i32) -> (i32, i32) {
    %c0_i32 = arith.constant 0 : i32
    return %arg0, %arg1 : i32, i32
  }
  func.func @transform_1(%arg0: i32, %arg1: i32) -> (i32, i32) {
    %c0_i32 = arith.constant 0 : i32
    %c0_i32_0 = arith.constant 0 : i32
    %c0_i32_1 = arith.constant 0 : i32
    return %c0_i32, %c0_i32_0 : i32, i32
  }
  func.func @transform_2(%arg0: i32, %arg1: i32) -> (i32, i32) {
    %c0_i32 = arith.constant 0 : i32
    %c0_i32_0 = arith.constant 0 : i32
    %c0_i32_1 = arith.constant 0 : i32
    return %c0_i32, %c0_i32_0 : i32, i32
  }
  func.func @transform_3(%arg0: i32, %arg1: i32) -> (i32, i32) {
    %c0_i32 = arith.constant 0 : i32
    %c0_i32_0 = arith.constant 0 : i32
    %c0_i32_1 = arith.constant 0 : i32
    return %c0_i32, %c0_i32_0 : i32, i32
  }
  func.func @transform_4(%arg0: i32, %arg1: i32) -> (i32, i32) {
    %c0_i32 = arith.constant 0 : i32
    %c0_i32_0 = arith.constant 0 : i32
    return %arg0, %c0_i32 : i32, i32
  }
}

module attributes {stable_mosaic.version = 11 : i64} {
  func.func @gcn_spmm_kernel(%arg0: i32, %arg1: i32, %arg2: memref<256x256xbf16, #tpu.memory_space<vmem>>, %arg3: memref<256x128xbf16, #tpu.memory_space<vmem>>, %arg4: memref<1x128xf32, #tpu.memory_space<vmem>>, %arg5: memref<1x128xf32, #tpu.memory_space<vmem>>, %arg6: memref<256x128xf32, #tpu.memory_space<vmem>>, %arg7: memref<256x128xf32, #tpu.memory_space<vmem>>) attributes {dimension_semantics = [#tpu.dimension_semantics<parallel>, #tpu.dimension_semantics<arbitrary>], iteration_bounds = array<i64: 1, 1>, scalar_prefetch = 0 : i64, scratch_operands = 1 : i64, tpu.core_type = #tpu.core_type<tc>, window_params = [{transform_indices = @transform_0, window_bounds = array<i64: 256, 256>}, {pipeline_mode = #tpu.pipeline_mode<synchronous>, transform_indices = @transform_1, window_bounds = array<i64: 256, 128>}, {pipeline_mode = #tpu.pipeline_mode<synchronous>, transform_indices = @transform_2, window_bounds = array<i64: 1, 128>}, {pipeline_mode = #tpu.pipeline_mode<synchronous>, transform_indices = @transform_3, window_bounds = array<i64: 1, 128>}, {transform_indices = @transform_4, window_bounds = array<i64: 256, 128>}]} {
    %c0_i32 = arith.constant 0 : i32
    %0 = arith.cmpi eq, %arg1, %c0_i32 : i32
    %1 = arith.extui %0 : i1 to i32
    %c0_i32_0 = arith.constant 0 : i32
    %2 = arith.cmpi ne, %1, %c0_i32_0 : i32
    scf.if %2 {
      %cst_9 = arith.constant 0.000000e+00 : f32
      %15 = vector.broadcast %cst_9 : f32 to vector<256x128xf32>
      %c0_10 = arith.constant 0 : index
      %c0_11 = arith.constant 0 : index
      %16 = vector.load %arg7[%c0_10, %c0_11] : memref<256x128xf32, #tpu.memory_space<vmem>>, vector<256x128xf32>
      tpu.vector_store %arg7[%c0_10, %c0_11], %15 {strides = array<i32>} : memref<256x128xf32, #tpu.memory_space<vmem>>, vector<256x128xf32>,
    } else {
    }
    %c256_i32 = arith.constant 256 : i32
    %3 = arith.muli %arg1, %c256_i32 : i32
    %4 = tpu.assume_multiple %3, 256 : i32
    %5 = arith.index_cast %4 : i32 to index
    %c0 = arith.constant 0 : index
    %6 = vector.load %arg3[%5, %c0] : memref<256x128xbf16, #tpu.memory_space<vmem>>, vector<256x128xbf16>
    %c0_1 = arith.constant 0 : index
    %c0_2 = arith.constant 0 : index
    %7 = vector.load %arg7[%c0_1, %c0_2] : memref<256x128xf32, #tpu.memory_space<vmem>>, vector<256x128xf32>
    %c0_3 = arith.constant 0 : index
    %c0_4 = arith.constant 0 : index
    %8 = vector.load %arg2[%c0_3, %c0_4] : memref<256x256xbf16, #tpu.memory_space<vmem>>, vector<256x256xbf16>
    %cst = arith.constant dense<0.000000e+00> : vector<256x128xf32>
    %9 = tpu.matmul %8, %6, %cst {dimension_numbers = #tpu.dot_dimension_numbers<[1], [0], [0], [1], [0, 0, 1, 1], [], []>} : vector<256x256xbf16>, vector<256x128xbf16>, vector<256x128xf32> -> vector<256x128xf32>
    %10 = arith.addf %7, %9 : vector<256x128xf32>
    %c0_5 = arith.constant 0 : index
    %c0_6 = arith.constant 0 : index
    %11 = vector.load %arg7[%c0_5, %c0_6] : memref<256x128xf32, #tpu.memory_space<vmem>>, vector<256x128xf32>
    tpu.vector_store %arg7[%c0_5, %c0_6], %10 {strides = array<i32>} : memref<256x128xf32, #tpu.memory_space<vmem>>, vector<256x128xf32>,
    %c0_i32_7 = arith.constant 0 : i32
    %12 = arith.cmpi eq, %arg1, %c0_i32_7 : i32
    %13 = arith.extui %12 : i1 to i32
    %c0_i32_8 = arith.constant 0 : i32
    %14 = arith.cmpi ne, %13, %c0_i32_8 : i32
    scf.if %14 {
      %c0_9 = arith.constant 0 : index
      %c0_10 = arith.constant 0 : index
      %15 = vector.load %arg7[%c0_9, %c0_10] : memref<256x128xf32, #tpu.memory_space<vmem>>, vector<256x128xf32>
      %c0_11 = arith.constant 0 : index
      %c0_12 = arith.constant 0 : index
      %16 = vector.load %arg4[%c0_11, %c0_12] : memref<1x128xf32, #tpu.memory_space<vmem>>, vector<1x128xf32>
      %17 = vector.broadcast %16 : vector<1x128xf32> to vector<256x128xf32>
      %18 = arith.mulf %15, %17 : vector<256x128xf32>
      %c0_13 = arith.constant 0 : index
      %c0_14 = arith.constant 0 : index
      %19 = vector.load %arg5[%c0_13, %c0_14] : memref<1x128xf32, #tpu.memory_space<vmem>>, vector<1x128xf32>
      %20 = vector.broadcast %19 : vector<1x128xf32> to vector<256x128xf32>
      %21 = arith.addf %18, %20 : vector<256x128xf32>
      %c0_15 = arith.constant 0 : index
      %c0_16 = arith.constant 0 : index
      %22 = vector.load %arg6[%c0_15, %c0_16] : memref<256x128xf32, #tpu.memory_space<vmem>>, vector<256x128xf32>
      tpu.vector_store %arg6[%c0_15, %c0_16], %21 {strides = array<i32>} : memref<256x128xf32, #tpu.memory_space<vmem>>, vector<256x128xf32>,
    } else {
    }
    return
  }
  func.func @transform_0(%arg0: i32, %arg1: i32) -> (i32, i32) {
    %c0_i32 = arith.constant 0 : i32
    return %arg0, %arg1 : i32, i32
  }
  func.func @transform_1(%arg0: i32, %arg1: i32) -> (i32, i32) {
    %c0_i32 = arith.constant 0 : i32
    %c0_i32_0 = arith.constant 0 : i32
    %c0_i32_1 = arith.constant 0 : i32
    return %c0_i32, %c0_i32_0 : i32, i32
  }
  func.func @transform_2(%arg0: i32, %arg1: i32) -> (i32, i32) {
    %c0_i32 = arith.constant 0 : i32
    %c0_i32_0 = arith.constant 0 : i32
    %c0_i32_1 = arith.constant 0 : i32
    return %c0_i32, %c0_i32_0 : i32, i32
  }
  func.func @transform_3(%arg0: i32, %arg1: i32) -> (i32, i32) {
    %c0_i32 = arith.constant 0 : i32
    %c0_i32_0 = arith.constant 0 : i32
    %c0_i32_1 = arith.constant 0 : i32
    return %c0_i32, %c0_i32_0 : i32, i32
  }
  func.func @transform_4(%arg0: i32, %arg1: i32) -> (i32, i32) {
    %c0_i32 = arith.constant 0 : i32
    %c0_i32_0 = arith.constant 0 : i32
    return %arg0, %c0_i32 : i32, i32
  }
}

</mosaic_0001>

<llo_original>
// kernel: graph_feature_encoder.3
$region0: #{graph_feature_encoder.3}
  #allocation0 [shape = 'u32[]', space=smem, size = 0x4, offset = 0x4, fixed_abs, tag = 'smem constant byte address 0x4 - core index']
  #allocation1 [shape = 'u32[144,128]{1,0:T(1,128)}', space=vmem, size = 0x12000, scoped, tag = 'internal scratch']
  #allocation2 [shape = 'f32[256,128]{1,0:T(8,128)}', space=vmem, size = 0x20000, scoped, tag = 'scratch operand']
  %s0 = inlined_call_operand.vmem [shape: bf16[256,256], index: 0, kind: input, shape index: {}]
  %s1 = inlined_call_operand.vmem [shape: bf16[256,128], index: 1, kind: input, shape index: {}]
  %s2 = inlined_call_operand.vmem [shape: f32[1,128], index: 2, kind: input, shape index: {}]
  %s3 = inlined_call_operand.vmem [shape: f32[1,128], index: 3, kind: input, shape index: {}]
  %s4 = inlined_call_operand.vmem [shape: bf16[256,128], index: 4, kind: output, shape index: {}]
  %s5 = sld [smem:[#allocation0]]
  $region34: #{graph_feature_encoder.3} parent=0
    _
  %s7 = ssub.s32 1, %s5
  %s8 = scalar_select 0, %s7, %s5
  // Predicated region
  $region2: #{graph_feature_encoder.3} parent=0 // pred_check
    _
  $region3: #{graph_feature_encoder.3} parent=0 // pred_check_branch
    %10 = sbr.rel (0) target = $region5
  $region4: #{graph_feature_encoder.3} parent=0 // pred_region
    _
  $region5: #{graph_feature_encoder.3} parent=0 // pred_fallthru
    _
  // Predicated region
  $region6: #{graph_feature_encoder.3} parent=0 // pred_check
    _
  $region7: #{graph_feature_encoder.3} parent=0 // pred_check_branch
    %12 = sbr.rel (0) target = $region9
  $region8: #{graph_feature_encoder.3} parent=0 // pred_region
    _
  $region9: #{graph_feature_encoder.3} parent=0 // pred_fallthru
    _
  // Predicated region
  $region10: #{graph_feature_encoder.3} parent=0 // pred_check
    _
  $region11: #{graph_feature_encoder.3} parent=0 // pred_check_branch
    %14 = sbr.rel (0) target = $region13
  $region12: #{graph_feature_encoder.3} parent=0 // pred_region
    _
  $region13: #{graph_feature_encoder.3} parent=0 // pred_fallthru
    _
  // Predicated region
  $region14: #{graph_feature_encoder.3} parent=0 // pred_check
    _
  $region15: #{graph_feature_encoder.3} parent=0 // pred_check_branch
    %16 = sbr.rel (0) target = $region17
  $region16: #{graph_feature_encoder.3} parent=0 // pred_region
    _
  $region17: #{graph_feature_encoder.3} parent=0 // pred_fallthru
    _
  %p18 = scmp.eq.s32.totalorder 0, 0
  // Predicated region
  $region18: #{graph_feature_encoder.3} parent=0 // pred_check
    %p19 = pneg %p18
  $region19: #{graph_feature_encoder.3} parent=0 // pred_check_branch
    %21 = sbr.rel (%p19) target = $region21
  $region20: #{graph_feature_encoder.3} parent=0 // pred_region
    %22 = vst [vmem:[#allocation2] sm:$0xff] 0.0
    %23 = vst [vmem:[#allocation2 + $0x8] sm:$0xff] 0.0
    %24 = vst [vmem:[#allocation2 + $0x10] sm:$0xff] 0.0
    %25 = vst [vmem:[#allocation2 + $0x18] sm:$0xff] 0.0
    %26 = vst [vmem:[#allocation2 + $0x20] sm:$0xff] 0.0
    %27 = vst [vmem:[#allocation2 + $0x28] sm:$0xff] 0.0
    %28 = vst [vmem:[#allocation2 + $0x30] sm:$0xff] 0.0
    %29 = vst [vmem:[#allocation2 + $0x38] sm:$0xff] 0.0
    %30 = vst [vmem:[#allocation2 + $0x40] sm:$0xff] 0.0
    %31 = vst [vmem:[#allocation2 + $0x48] sm:$0xff] 0.0
    %32 = vst [vmem:[#allocation2 + $0x50] sm:$0xff] 0.0
    %33 = vst [vmem:[#allocation2 + $0x58] sm:$0xff] 0.0
    %34 = vst [vmem:[#allocation2 + $0x60] sm:$0xff] 0.0
    %35 = vst [vmem:[#allocation2 + $0x68] sm:$0xff] 0.0
    %36 = vst [vmem:[#allocation2 + $0x70] sm:$0xff] 0.0
    %37 = vst [vmem:[#allocation2 + $0x78] sm:$0xff] 0.0
    %38 = vst [vmem:[#allocation2 + $0x80] sm:$0xff] 0.0
    %39 = vst [vmem:[#allocation2 + $0x88] sm:$0xff] 0.0
    %40 = vst [vmem:[#allocation2 + $0x90] sm:$0xff] 0.0
    %41 = vst [vmem:[#allocation2 + $0x98] sm:$0xff] 0.0
    %42 = vst [vmem:[#allocation2 + $0xa0] sm:$0xff] 0.0
    %43 = vst [vmem:[#allocation2 + $0xa8] sm:$0xff] 0.0
    %44 = vst [vmem:[#allocation2 + $0xb0] sm:$0xff] 0.0
    %45 = vst [vmem:[#allocation2 + $0xb8] sm:$0xff] 0.0
    %46 = vst [vmem:[#allocation2 + $0xc0] sm:$0xff] 0.0
    %47 = vst [vmem:[#allocation2 + $0xc8] sm:$0xff] 0.0
    %48 = vst [vmem:[#allocation2 + $0xd0] sm:$0xff] 0.0
    %49 = vst [vmem:[#allocation2 + $0xd8] sm:$0xff] 0.0
    %50 = vst [vmem:[#allocation2 + $0xe0] sm:$0xff] 0.0
    %51 = vst [vmem:[#allocation2 + $0xe8] sm:$0xff] 0.0
    %52 = vst [vmem:[#allocation2 + $0xf0] sm:$0xff] 0.0
    %53 = vst [vmem:[#allocation2 + $0xf8] sm:$0xff] 0.0
  $region21: #{graph_feature_encoder.3} parent=0 // pred_fallthru
    _
  %s54 = smul.u32 0, 256
  %s55 = sshra.s32 %s54, 3
  %s56 = sand.u32 %s54, 7
  %s57 = smul.addr %s55, 4
  %s58 = scalar_lea.vmem %s1, %s57
  %v59 = vld [vmem:[%s58] sm:$0xf]
  %v60 = vld [vmem:[%s58 + $0x4] sm:$0xf]
  %v61 = vld [vmem:[%s58 + $0x8] sm:$0xf]
  %v62 = vld [vmem:[%s58 + $0xc] sm:$0xf]
  %v63 = vld [vmem:[%s58 + $0x10] sm:$0xf]
  %v64 = vld [vmem:[%s58 + $0x14] sm:$0xf]
  %v65 = vld [vmem:[%s58 + $0x18] sm:$0xf]
  %v66 = vld [vmem:[%s58 + $0x1c] sm:$0xf]
  %v67 = vld [vmem:[%s58 + $0x20] sm:$0xf]
  %v68 = vld [vmem:[%s58 + $0x24] sm:$0xf]
  %v69 = vld [vmem:[%s58 + $0x28] sm:$0xf]
  %v70 = vld [vmem:[%s58 + $0x2c] sm:$0xf]
  %v71 = vld [vmem:[%s58 + $0x30] sm:$0xf]
  %v72 = vld [vmem:[%s58 + $0x34] sm:$0xf]
  %v73 = vld [vmem:[%s58 + $0x38] sm:$0xf]
  %v74 = vld [vmem:[%s58 + $0x3c] sm:$0xf]
  %v75 = vld [vmem:[%s58 + $0x40] sm:$0xf]
  %v76 = vld [vmem:[%s58 + $0x44] sm:$0xf]
  %v77 = vld [vmem:[%s58 + $0x48] sm:$0xf]
  %v78 = vld [vmem:[%s58 + $0x4c] sm:$0xf]
  %v79 = vld [vmem:[%s58 + $0x50] sm:$0xf]
  %v80 = vld [vmem:[%s58 + $0x54] sm:$0xf]
  %v81 = vld [vmem:[%s58 + $0x58] sm:$0xf]
  %v82 = vld [vmem:[%s58 + $0x5c] sm:$0xf]
  %v83 = vld [vmem:[%s58 + $0x60] sm:$0xf]
  %v84 = vld [vmem:[%s58 + $0x64] sm:$0xf]
  %v85 = vld [vmem:[%s58 + $0x68] sm:$0xf]
  %v86 = vld [vmem:[%s58 + $0x6c] sm:$0xf]
  %v87 = vld [vmem:[%s58 + $0x70] sm:$0xf]
  %v88 = vld [vmem:[%s58 + $0x74] sm:$0xf]
  %v89 = vld [vmem:[%s58 + $0x78] sm:$0xf]
  %v90 = vld [vmem:[%s58 + $0x7c] sm:$0xf]
  %v91 = vld [vmem:[#allocation2] sm:$0xff]
  %v92 = vld [vmem:[#allocation2 + $0x8] sm:$0xff]
  %v93 = vld [vmem:[#allocation2 + $0x10] sm:$0xff]
  %v94 = vld [vmem:[#allocation2 + $0x18] sm:$0xff]
  %v95 = vld [vmem:[#allocation2 + $0x20] sm:$0xff]
  %v96 = vld [vmem:[#allocation2 + $0x28] sm:$0xff]
  %v97 = vld [vmem:[#allocation2 + $0x30] sm:$0xff]
  %v98 = vld [vmem:[#allocation2 + $0x38] sm:$0xff]
  %v99 = vld [vmem:[#allocation2 + $0x40] sm:$0xff]
  %v100 = vld [vmem:[#allocation2 + $0x48] sm:$0xff]
  %v101 = vld [vmem:[#allocation2 + $0x50] sm:$0xff]
  %v102 = vld [vmem:[#allocation2 + $0x58] sm:$0xff]
  %v103 = vld [vmem:[#allocation2 + $0x60] sm:$0xff]
  %v104 = vld [vmem:[#allocation2 + $0x68] sm:$0xff]
  %v105 = vld [vmem:[#allocation2 + $0x70] sm:$0xff]
  %v106 = vld [vmem:[#allocation2 + $0x78] sm:$0xff]
  %v107 = vld [vmem:[#allocation2 + $0x80] sm:$0xff]
  %v108 = vld [vmem:[#allocation2 + $0x88] sm:$0xff]
  %v109 = vld [vmem:[#allocation2 + $0x90] sm:$0xff]
  %v110 = vld [vmem:[#allocation2 + $0x98] sm:$0xff]
  %v111 = vld [vmem:[#allocation2 + $0xa0] sm:$0xff]
  %v112 = vld [vmem:[#allocation2 + $0xa8] sm:$0xff]
  %v113 = vld [vmem:[#allocation2 + $0xb0] sm:$0xff]
  %v114 = vld [vmem:[#allocation2 + $0xb8] sm:$0xff]
  %v115 = vld [vmem:[#allocation2 + $0xc0] sm:$0xff]
  %v116 = vld [vmem:[#allocation2 + $0xc8] sm:$0xff]
  %v117 = vld [vmem:[#allocation2 + $0xd0] sm:$0xff]
  %v118 = vld [vmem:[#allocation2 + $0xd8] sm:$0xff]
  %v119 = vld [vmem:[#allocation2 + $0xe0] sm:$0xff]
  %v120 = vld [vmem:[#allocation2 + $0xe8] sm:$0xff]
  %v121 = vld [vmem:[#allocation2 + $0xf0] sm:$0xff]
  %v122 = vld [vmem:[#allocation2 + $0xf8] sm:$0xff]
  %v123 = vld [vmem:[%s0] sm:$0xff]
  %v124 = vld [vmem:[%s0 + $0x8] sm:$0xff]
  %v125 = vld [vmem:[%s0 + $0x10] sm:$0xff]
  %v126 = vld [vmem:[%s0 + $0x18] sm:$0xff]
  %v127 = vld [vmem:[%s0 + $0x20] sm:$0xff]
  %v128 = vld [vmem:[%s0 + $0x28] sm:$0xff]
  %v129 = vld [vmem:[%s0 + $0x30] sm:$0xff]
  %v130 = vld [vmem:[%s0 + $0x38] sm:$0xff]
  %v131 = vld [vmem:[%s0 + $0x40] sm:$0xff]
  %v132 = vld [vmem:[%s0 + $0x48] sm:$0xff]
  %v133 = vld [vmem:[%s0 + $0x50] sm:$0xff]
  %v134 = vld [vmem:[%s0 + $0x58] sm:$0xff]
  %v135 = vld [vmem:[%s0 + $0x60] sm:$0xff]
  %v136 = vld [vmem:[%s0 + $0x68] sm:$0xff]
  %v137 = vld [vmem:[%s0 + $0x70] sm:$0xff]
  %v138 = vld [vmem:[%s0 + $0x78] sm:$0xff]
  %v139 = vld [vmem:[%s0 + $0x80] sm:$0xff]
  %v140 = vld [vmem:[%s0 + $0x88] sm:$0xff]
  %v141 = vld [vmem:[%s0 + $0x90] sm:$0xff]
  %v142 = vld [vmem:[%s0 + $0x98] sm:$0xff]
  %v143 = vld [vmem:[%s0 + $0xa0] sm:$0xff]
  %v144 = vld [vmem:[%s0 + $0xa8] sm:$0xff]
  %v145 = vld [vmem:[%s0 + $0xb0] sm:$0xff]
  %v146 = vld [vmem:[%s0 + $0xb8] sm:$0xff]
  %v147 = vld [vmem:[%s0 + $0xc0] sm:$0xff]
  %v148 = vld [vmem:[%s0 + $0xc8] sm:$0xff]
  %v149 = vld [vmem:[%s0 + $0xd0] sm:$0xff]
  %v150 = vld [vmem:[%s0 + $0xd8] sm:$0xff]
  %v151 = vld [vmem:[%s0 + $0xe0] sm:$0xff]
  %v152 = vld [vmem:[%s0 + $0xe8] sm:$0xff]
  %v153 = vld [vmem:[%s0 + $0xf0] sm:$0xff]
  %v154 = vld [vmem:[%s0 + $0xf8] sm:$0xff]
  %v187 = vunpack.c.l.b16 %v123
  %v188 = vunpack.c.h.b16 %v123
  %v189 = vunpack.c.l.b16 %v124
  %v190 = vunpack.c.h.b16 %v124
  %v191 = vunpack.c.l.b16 %v125
  %v192 = vunpack.c.h.b16 %v125
  %v193 = vunpack.c.l.b16 %v126
  %v194 = vunpack.c.h.b16 %v126
  %v195 = vunpack.c.l.b16 %v127
  %v196 = vunpack.c.h.b16 %v127
  %v197 = vunpack.c.l.b16 %v128
  %v198 = vunpack.c.h.b16 %v128
  %v199 = vunpack.c.l.b16 %v129
  %v200 = vunpack.c.h.b16 %v129
  %v201 = vunpack.c.l.b16 %v130
  %v202 = vunpack.c.h.b16 %v130
  %v203 = vunpack.c.l.b16 %v131
  %v204 = vunpack.c.h.b16 %v131
  %v205 = vunpack.c.l.b16 %v132
  %v206 = vunpack.c.h.b16 %v132
  %v207 = vunpack.c.l.b16 %v133
  %v208 = vunpack.c.h.b16 %v133
  %v209 = vunpack.c.l.b16 %v134
  %v210 = vunpack.c.h.b16 %v134
  %v211 = vunpack.c.l.b16 %v135
  %v212 = vunpack.c.h.b16 %v135
  %v213 = vunpack.c.l.b16 %v136
  %v214 = vunpack.c.h.b16 %v136
  %v215 = vunpack.c.l.b16 %v137
  %v216 = vunpack.c.h.b16 %v137
  %v217 = vunpack.c.l.b16 %v138
  %v218 = vunpack.c.h.b16 %v138
  %v219 = vunpack.c.l.b16 %v139
  %v220 = vunpack.c.h.b16 %v139
  %v221 = vunpack.c.l.b16 %v140
  %v222 = vunpack.c.h.b16 %v140
  %v223 = vunpack.c.l.b16 %v141
  %v224 = vunpack.c.h.b16 %v141
  %v225 = vunpack.c.l.b16 %v142
  %v226 = vunpack.c.h.b16 %v142
  %v227 = vunpack.c.l.b16 %v143
  %v228 = vunpack.c.h.b16 %v143
  %v229 = vunpack.c.l.b16 %v144
  %v230 = vunpack.c.h.b16 %v144
  %v231 = vunpack.c.l.b16 %v145
  %v232 = vunpack.c.h.b16 %v145
  %v233 = vunpack.c.l.b16 %v146
  %v234 = vunpack.c.h.b16 %v146
  %v235 = vunpack.c.l.b16 %v147
  %v236 = vunpack.c.h.b16 %v147
  %v237 = vunpack.c.l.b16 %v148
  %v238 = vunpack.c.h.b16 %v148
  %v239 = vunpack.c.l.b16 %v149
  %v240 = vunpack.c.h.b16 %v149
  %v241 = vunpack.c.l.b16 %v150
  %v242 = vunpack.c.h.b16 %v150
  %v243 = vunpack.c.l.b16 %v151
  %v244 = vunpack.c.h.b16 %v151
  %v245 = vunpack.c.l.b16 %v152
  %v246 = vunpack.c.h.b16 %v152
  %v247 = vunpack.c.l.b16 %v153
  %v248 = vunpack.c.h.b16 %v153
  %v249 = vunpack.c.l.b16 %v154
  %v250 = vunpack.c.h.b16 %v154
  %v251 = vpack.c.b16 %v189, %v187
  %v252 = vpack.c.b16 %v190, %v188
  %v253 = vpack.c.b16 %v193, %v191
  %v254 = vpack.c.b16 %v194, %v192
  %v255 = vpack.c.b16 %v197, %v195
  %v256 = vpack.c.b16 %v198, %v196
  %v257 = vpack.c.b16 %v201, %v199
  %v258 = vpack.c.b16 %v202, %v200
  %v259 = vpack.c.b16 %v205, %v203
  %v260 = vpack.c.b16 %v206, %v204
  %v261 = vpack.c.b16 %v209, %v207
  %v262 = vpack.c.b16 %v210, %v208
  %v263 = vpack.c.b16 %v213, %v211
  %v264 = vpack.c.b16 %v214, %v212
  %v265 = vpack.c.b16 %v217, %v215
  %v266 = vpack.c.b16 %v218, %v216
  %v267 = vpack.c.b16 %v221, %v219
  %v268 = vpack.c.b16 %v222, %v220
  %v269 = vpack.c.b16 %v225, %v223
  %v270 = vpack.c.b16 %v226, %v224
  %v271 = vpack.c.b16 %v229, %v227
  %v272 = vpack.c.b16 %v230, %v228
  %v273 = vpack.c.b16 %v233, %v231
  %v274 = vpack.c.b16 %v234, %v232
  %v275 = vpack.c.b16 %v237, %v235
  %v276 = vpack.c.b16 %v238, %v236
  %v277 = vpack.c.b16 %v241, %v239
  %v278 = vpack.c.b16 %v242, %v240
  %v279 = vpack.c.b16 %v245, %v243
  %v280 = vpack.c.b16 %v246, %v244
  %v281 = vpack.c.b16 %v249, %v247
  %v282 = vpack.c.b16 %v250, %v248
  %v347 = vunpack.c.l.b16 %v59
  %v348 = vunpack.c.l.b16 %v60
  %v349 = vunpack.c.l.b16 %v61
  %v350 = vunpack.c.l.b16 %v62
  %v351 = vunpack.c.l.b16 %v63
  %v352 = vunpack.c.l.b16 %v64
  %v353 = vunpack.c.l.b16 %v65
  %v354 = vunpack.c.l.b16 %v66
  %v355 = vunpack.c.l.b16 %v67
  %v356 = vunpack.c.l.b16 %v68
  %v357 = vunpack.c.l.b16 %v69
  %v358 = vunpack.c.l.b16 %v70
  %v359 = vunpack.c.l.b16 %v71
  %v360 = vunpack.c.l.b16 %v72
  %v361 = vunpack.c.l.b16 %v73
  %v362 = vunpack.c.l.b16 %v74
  %v363 = vunpack.c.l.b16 %v75
  %v364 = vunpack.c.l.b16 %v76
  %v365 = vunpack.c.l.b16 %v77
  %v366 = vunpack.c.l.b16 %v78
  %v367 = vunpack.c.l.b16 %v79
  %v368 = vunpack.c.l.b16 %v80
  %v369 = vunpack.c.l.b16 %v81
  %v370 = vunpack.c.l.b16 %v82
  %v371 = vunpack.c.l.b16 %v83
  %v372 = vunpack.c.l.b16 %v84
  %v373 = vunpack.c.l.b16 %v85
  %v374 = vunpack.c.l.b16 %v86
  %v375 = vunpack.c.l.b16 %v87
  %v376 = vunpack.c.l.b16 %v88
  %v377 = vunpack.c.l.b16 %v89
  %v378 = vunpack.c.l.b16 %v90
  %v379 = vpack.c.b16 %v348, %v347
  %v380 = vpack.c.b16 %v350, %v349
  %v381 = vpack.c.b16 %v352, %v351
  %v382 = vpack.c.b16 %v354, %v353
  %v383 = vpack.c.b16 %v356, %v355
  %v384 = vpack.c.b16 %v358, %v357
  %v385 = vpack.c.b16 %v360, %v359
  %v386 = vpack.c.b16 %v362, %v361
  %v387 = vpack.c.b16 %v364, %v363
  %v388 = vpack.c.b16 %v366, %v365
  %v389 = vpack.c.b16 %v368, %v367
  %v390 = vpack.c.b16 %v370, %v369
  %v391 = vpack.c.b16 %v372, %v371
  %v392 = vpack.c.b16 %v374, %v373
  %v393 = vpack.c.b16 %v376, %v375
  %v394 = vpack.c.b16 %v378, %v377
  %411 = vmatprep.subr.bf16.mxu0 0
  %412 = vmatpush1.bf16.msra.mxu0 %v386
  %413 = vmatprep.subr.bf16.mxu0 0
  %414 = vmatpush1.bf16.msra.mxu0 %v385
  %415 = vmatprep.subr.bf16.mxu0 0
  %416 = vmatpush1.bf16.msra.mxu0 %v384
  %417 = vmatprep.subr.bf16.mxu0 0
  %418 = vmatpush1.bf16.msra.mxu0 %v383
  %419 = vmatprep.subr.bf16.mxu0 0
  %420 = vmatpush1.bf16.msra.mxu0 %v382
  %421 = vmatprep.subr.bf16.mxu0 0
  %422 = vmatpush1.bf16.msra.mxu0 %v381
  %423 = vmatprep.subr.bf16.mxu0 0
  %424 = vmatpush1.bf16.msra.mxu0 %v380
  %425 = vmatprep.subr.bf16.mxu0 0
  %426 = vmatpush1.bf16.msra.mxu0 %v379
  %427 = vmatprep.subr.bf16.mxu0 0
  %428 = vmatpush2.bf16.msra.mxu0 %v394
  %429 = vmatprep.subr.bf16.mxu0 0
  %430 = vmatpush2.bf16.msra.mxu0 %v393
  %431 = vmatprep.subr.bf16.mxu0 0
  %432 = vmatpush2.bf16.msra.mxu0 %v392
  %433 = vmatprep.subr.bf16.mxu0 0
  %434 = vmatpush2.bf16.msra.mxu0 %v391
  %435 = vmatprep.subr.bf16.mxu0 0
  %436 = vmatpush2.bf16.msra.mxu0 %v390
  %437 = vmatprep.subr.bf16.mxu0 0
  %438 = vmatpush2.bf16.msra.mxu0 %v389
  %439 = vmatprep.subr.bf16.mxu0 0
  %440 = vmatpush2.bf16.msra.mxu0 %v388
  %441 = vmatprep.subr.bf16.mxu0 0
  %442 = vmatpush2.bf16.msra.mxu0 %v387
  %443 = vmatprep.mubr.bf16.mxu0 %v252
  %444 = vmatmul.mubr.bf16.gmra.mxu0 %v251
  %v445 = vpop.f32.mrf.mxu0
  %v446 = vadd.f32 0.0, %v445
  %v447 = vpop.f32.mrf.mxu0
  %v448 = vpop.f32.mrf.mxu0
  %v449 = vadd.f32 0.0, %v448
  %v450 = vpop.f32.mrf.mxu0
  %451 = vmatprep.mubr.bf16.mxu0 %v254
  %452 = vmatmul.mubr.bf16.gmra.mxu0 %v253
  %v453 = vpop.f32.mrf.mxu0
  %v454 = vadd.f32 0.0, %v453
  %v455 = vpop.f32.mrf.mxu0
  %v456 = vpop.f32.mrf.mxu0
  %v457 = vadd.f32 0.0, %v456
  %v458 = vpop.f32.mrf.mxu0
  %459 = vmatprep.mubr.bf16.mxu0 %v256
  %460 = vmatmul.mubr.bf16.gmra.mxu0 %v255
  %v461 = vpop.f32.mrf.mxu0
  %v462 = vadd.f32 0.0, %v461
  %v463 = vpop.f32.mrf.mxu0
  %v464 = vpop.f32.mrf.mxu0
  %v465 = vadd.f32 0.0, %v464
  %v466 = vpop.f32.mrf.mxu0
  %467 = vmatprep.mubr.bf16.mxu0 %v258
  %468 = vmatmul.mubr.bf16.gmra.mxu0 %v257
  %v469 = vpop.f32.mrf.mxu0
  %v470 = vadd.f32 0.0, %v469
  %v471 = vpop.f32.mrf.mxu0
  %v472 = vpop.f32.mrf.mxu0
  %v473 = vadd.f32 0.0, %v472
  %v474 = vpop.f32.mrf.mxu0
  %475 = vmatprep.mubr.bf16.mxu0 %v260
  %476 = vmatmul.mubr.bf16.gmra.mxu0 %v259
  %v477 = vpop.f32.mrf.mxu0
  %v478 = vadd.f32 0.0, %v477
  %v479 = vpop.f32.mrf.mxu0
  %v480 = vpop.f32.mrf.mxu0
  %v481 = vadd.f32 0.0, %v480
  %v482 = vpop.f32.mrf.mxu0
  %483 = vmatprep.mubr.bf16.mxu0 %v262
  %484 = vmatmul.mubr.bf16.gmra.mxu0 %v261
  %v485 = vpop.f32.mrf.mxu0
  %v486 = vadd.f32 0.0, %v485
  %v487 = vpop.f32.mrf.mxu0
  %v488 = vpop.f32.mrf.mxu0
  %v489 = vadd.f32 0.0, %v488
  %v490 = vpop.f32.mrf.mxu0
  %491 = vmatprep.mubr.bf16.mxu0 %v264
  %492 = vmatmul.mubr.bf16.gmra.mxu0 %v263
  %v493 = vpop.f32.mrf.mxu0
  %v494 = vadd.f32 0.0, %v493
  %v495 = vpop.f32.mrf.mxu0
  %v496 = vpop.f32.mrf.mxu0
  %v497 = vadd.f32 0.0, %v496
  %v498 = vpop.f32.mrf.mxu0
  %499 = vmatprep.mubr.bf16.mxu0 %v266
  %500 = vmatmul.mubr.bf16.gmra.mxu0 %v265
  %v501 = vpop.f32.mrf.mxu0
  %v502 = vadd.f32 0.0, %v501
  %v503 = vpop.f32.mrf.mxu0
  %v504 = vpop.f32.mrf.mxu0
  %v505 = vadd.f32 0.0, %v504
  %v506 = vpop.f32.mrf.mxu0
  %507 = vmatprep.mubr.bf16.mxu0 %v268
  %508 = vmatmul.mubr.bf16.gmra.mxu0 %v267
  %v509 = vpop.f32.mrf.mxu0
  %v510 = vadd.f32 0.0, %v509
  %v511 = vpop.f32.mrf.mxu0
  %v512 = vpop.f32.mrf.mxu0
  %v513 = vadd.f32 0.0, %v512
  %v514 = vpop.f32.mrf.mxu0
  %515 = vmatprep.mubr.bf16.mxu0 %v270
  %516 = vmatmul.mubr.bf16.gmra.mxu0 %v269
  %v517 = vpop.f32.mrf.mxu0
  %v518 = vadd.f32 0.0, %v517
  %v519 = vpop.f32.mrf.mxu0
  %v520 = vpop.f32.mrf.mxu0
  %v521 = vadd.f32 0.0, %v520
  %v522 = vpop.f32.mrf.mxu0
  %523 = vmatprep.mubr.bf16.mxu0 %v272
  %524 = vmatmul.mubr.bf16.gmra.mxu0 %v271
  %v525 = vpop.f32.mrf.mxu0
  %v526 = vadd.f32 0.0, %v525
  %v527 = vpop.f32.mrf.mxu0
  %v528 = vpop.f32.mrf.mxu0
  %v529 = vadd.f32 0.0, %v528
  %v530 = vpop.f32.mrf.mxu0
  %531 = vmatprep.mubr.bf16.mxu0 %v274
  %532 = vmatmul.mubr.bf16.gmra.mxu0 %v273
  %v533 = vpop.f32.mrf.mxu0
  %v534 = vadd.f32 0.0, %v533
  %v535 = vpop.f32.mrf.mxu0
  %v536 = vpop.f32.mrf.mxu0
  %v537 = vadd.f32 0.0, %v536
  %v538 = vpop.f32.mrf.mxu0
  %539 = vmatprep.mubr.bf16.mxu0 %v276
  %540 = vmatmul.mubr.bf16.gmra.mxu0 %v275
  %v541 = vpop.f32.mrf.mxu0
  %v542 = vadd.f32 0.0, %v541
  %v543 = vpop.f32.mrf.mxu0
  %v544 = vpop.f32.mrf.mxu0
  %v545 = vadd.f32 0.0, %v544
  %v546 = vpop.f32.mrf.mxu0
  %547 = vmatprep.mubr.bf16.mxu0 %v278
  %548 = vmatmul.mubr.bf16.gmra.mxu0 %v277
  %v549 = vpop.f32.mrf.mxu0
  %v550 = vadd.f32 0.0, %v549
  %v551 = vpop.f32.mrf.mxu0
  %v552 = vpop.f32.mrf.mxu0
  %v553 = vadd.f32 0.0, %v552
  %v554 = vpop.f32.mrf.mxu0
  %555 = vmatprep.mubr.bf16.mxu0 %v280
  %556 = vmatmul.mubr.bf16.gmra.mxu0 %v279
  %v557 = vpop.f32.mrf.mxu0
  %v558 = vadd.f32 0.0, %v557
  %v559 = vpop.f32.mrf.mxu0
  %v560 = vpop.f32.mrf.mxu0
  %v561 = vadd.f32 0.0, %v560
  %v562 = vpop.f32.mrf.mxu0
  %563 = vmatprep.mubr.bf16.mxu0 %v282
  %564 = vmatmul.mubr.bf16.gmra.mxu0 %v281
  %v565 = vpop.f32.mrf.mxu0
  %v566 = vadd.f32 0.0, %v565
  %v567 = vpop.f32.mrf.mxu0
  %v568 = vpop.f32.mrf.mxu0
  %v569 = vadd.f32 0.0, %v568
  %v570 = vpop.f32.mrf.mxu0
  %571 = vdwg.mxu0
  %v572 = vadd.f32 %v91, %v446
  %v573 = vadd.f32 %v92, %v449
  %v574 = vadd.f32 %v93, %v454
  %v575 = vadd.f32 %v94, %v457
  %v576 = vadd.f32 %v95, %v462
  %v577 = vadd.f32 %v96, %v465
  %v578 = vadd.f32 %v97, %v470
  %v579 = vadd.f32 %v98, %v473
  %v580 = vadd.f32 %v99, %v478
  %v581 = vadd.f32 %v100, %v481
  %v582 = vadd.f32 %v101, %v486
  %v583 = vadd.f32 %v102, %v489
  %v584 = vadd.f32 %v103, %v494
  %v585 = vadd.f32 %v104, %v497
  %v586 = vadd.f32 %v105, %v502
  %v587 = vadd.f32 %v106, %v505
  %v588 = vadd.f32 %v107, %v510
  %v589 = vadd.f32 %v108, %v513
  %v590 = vadd.f32 %v109, %v518
  %v591 = vadd.f32 %v110, %v521
  %v592 = vadd.f32 %v111, %v526
  %v593 = vadd.f32 %v112, %v529
  %v594 = vadd.f32 %v113, %v534
  %v595 = vadd.f32 %v114, %v537
  %v596 = vadd.f32 %v115, %v542
  %v597 = vadd.f32 %v116, %v545
  %v598 = vadd.f32 %v117, %v550
  %v599 = vadd.f32 %v118, %v553
  %v600 = vadd.f32 %v119, %v558
  %v601 = vadd.f32 %v120, %v561
  %v602 = vadd.f32 %v121, %v566
  %v603 = vadd.f32 %v122, %v569
  %604 = vst [vmem:[#allocation2] sm:$0xff] %v572
  %605 = vst [vmem:[#allocation2 + $0x8] sm:$0xff] %v573
  %606 = vst [vmem:[#allocation2 + $0x10] sm:$0xff] %v574
  %607 = vst [vmem:[#allocation2 + $0x18] sm:$0xff] %v575
  %608 = vst [vmem:[#allocation2 + $0x20] sm:$0xff] %v576
  %609 = vst [vmem:[#allocation2 + $0x28] sm:$0xff] %v577
  %610 = vst [vmem:[#allocation2 + $0x30] sm:$0xff] %v578
  %611 = vst [vmem:[#allocation2 + $0x38] sm:$0xff] %v579
  %612 = vst [vmem:[#allocation2 + $0x40] sm:$0xff] %v580
  %613 = vst [vmem:[#allocation2 + $0x48] sm:$0xff] %v581
  %614 = vst [vmem:[#allocation2 + $0x50] sm:$0xff] %v582
  %615 = vst [vmem:[#allocation2 + $0x58] sm:$0xff] %v583
  %616 = vst [vmem:[#allocation2 + $0x60] sm:$0xff] %v584
  %617 = vst [vmem:[#allocation2 + $0x68] sm:$0xff] %v585
  %618 = vst [vmem:[#allocation2 + $0x70] sm:$0xff] %v586
  %619 = vst [vmem:[#allocation2 + $0x78] sm:$0xff] %v587
  %620 = vst [vmem:[#allocation2 + $0x80] sm:$0xff] %v588
  %621 = vst [vmem:[#allocation2 + $0x88] sm:$0xff] %v589
  %622 = vst [vmem:[#allocation2 + $0x90] sm:$0xff] %v590
  %623 = vst [vmem:[#allocation2 + $0x98] sm:$0xff] %v591
  %624 = vst [vmem:[#allocation2 + $0xa0] sm:$0xff] %v592
  %625 = vst [vmem:[#allocation2 + $0xa8] sm:$0xff] %v593
  %626 = vst [vmem:[#allocation2 + $0xb0] sm:$0xff] %v594
  %627 = vst [vmem:[#allocation2 + $0xb8] sm:$0xff] %v595
  %628 = vst [vmem:[#allocation2 + $0xc0] sm:$0xff] %v596
  %629 = vst [vmem:[#allocation2 + $0xc8] sm:$0xff] %v597
  %630 = vst [vmem:[#allocation2 + $0xd0] sm:$0xff] %v598
  %631 = vst [vmem:[#allocation2 + $0xd8] sm:$0xff] %v599
  %632 = vst [vmem:[#allocation2 + $0xe0] sm:$0xff] %v600
  %633 = vst [vmem:[#allocation2 + $0xe8] sm:$0xff] %v601
  %634 = vst [vmem:[#allocation2 + $0xf0] sm:$0xff] %v602
  %635 = vst [vmem:[#allocation2 + $0xf8] sm:$0xff] %v603
  // Predicated region
  $region22: #{graph_feature_encoder.3} parent=0 // pred_check
    %p636 = pneg %p18
  $region23: #{graph_feature_encoder.3} parent=0 // pred_check_branch
    %638 = sbr.rel (%p636) target = $region25
  $region24: #{graph_feature_encoder.3} parent=0 // pred_region
    %v639 = vld [vmem:[#allocation2] sm:$0xff]
    %v640 = vld [vmem:[#allocation2 + $0x8] sm:$0xff]
    %v641 = vld [vmem:[#allocation2 + $0x10] sm:$0xff]
    %v642 = vld [vmem:[#allocation2 + $0x18] sm:$0xff]
    %v643 = vld [vmem:[#allocation2 + $0x20] sm:$0xff]
    %v644 = vld [vmem:[#allocation2 + $0x28] sm:$0xff]
    %v645 = vld [vmem:[#allocation2 + $0x30] sm:$0xff]
    %v646 = vld [vmem:[#allocation2 + $0x38] sm:$0xff]
    %v647 = vld [vmem:[#allocation2 + $0x40] sm:$0xff]
    %v648 = vld [vmem:[#allocation2 + $0x48] sm:$0xff]
    %v649 = vld [vmem:[#allocation2 + $0x50] sm:$0xff]
    %v650 = vld [vmem:[#allocation2 + $0x58] sm:$0xff]
    %v651 = vld [vmem:[#allocation2 + $0x60] sm:$0xff]
    %v652 = vld [vmem:[#allocation2 + $0x68] sm:$0xff]
    %v653 = vld [vmem:[#allocation2 + $0x70] sm:$0xff]
    %v654 = vld [vmem:[#allocation2 + $0x78] sm:$0xff]
    %v655 = vld [vmem:[#allocation2 + $0x80] sm:$0xff]
    %v656 = vld [vmem:[#allocation2 + $0x88] sm:$0xff]
    %v657 = vld [vmem:[#allocation2 + $0x90] sm:$0xff]
    %v658 = vld [vmem:[#allocation2 + $0x98] sm:$0xff]
    %v659 = vld [vmem:[#allocation2 + $0xa0] sm:$0xff]
    %v660 = vld [vmem:[#allocation2 + $0xa8] sm:$0xff]
    %v661 = vld [vmem:[#allocation2 + $0xb0] sm:$0xff]
    %v662 = vld [vmem:[#allocation2 + $0xb8] sm:$0xff]
    %v663 = vld [vmem:[#allocation2 + $0xc0] sm:$0xff]
    %v664 = vld [vmem:[#allocation2 + $0xc8] sm:$0xff]
    %v665 = vld [vmem:[#allocation2 + $0xd0] sm:$0xff]
    %v666 = vld [vmem:[#allocation2 + $0xd8] sm:$0xff]
    %v667 = vld [vmem:[#allocation2 + $0xe0] sm:$0xff]
    %v668 = vld [vmem:[#allocation2 + $0xe8] sm:$0xff]
    %v669 = vld [vmem:[#allocation2 + $0xf0] sm:$0xff]
    %v670 = vld [vmem:[#allocation2 + $0xf8] sm:$0xff]
    %v671 = vld [vmem:[%s2] sm:$0x1]
    %v673 = vlaneseq
    %v674 = vshrl.u32 %v673, 7
    %v675 = vsub.s32 0, %v674
    %v676 = vrot.slane %v671, %v675
    %v678 = vmul.f32 %v639, %v676
    %v679 = vmul.f32 %v640, %v676
    %v680 = vmul.f32 %v641, %v676
    %v681 = vmul.f32 %v642, %v676
    %v682 = vmul.f32 %v643, %v676
    %v683 = vmul.f32 %v644, %v676
    %v684 = vmul.f32 %v645, %v676
    %v685 = vmul.f32 %v646, %v676
    %v686 = vmul.f32 %v647, %v676
    %v687 = vmul.f32 %v648, %v676
    %v688 = vmul.f32 %v649, %v676
    %v689 = vmul.f32 %v650, %v676
    %v690 = vmul.f32 %v651, %v676
    %v691 = vmul.f32 %v652, %v676
    %v692 = vmul.f32 %v653, %v676
    %v693 = vmul.f32 %v654, %v676
    %v694 = vmul.f32 %v655, %v676
    %v695 = vmul.f32 %v656, %v676
    %v696 = vmul.f32 %v657, %v676
    %v697 = vmul.f32 %v658, %v676
    %v698 = vmul.f32 %v659, %v676
    %v699 = vmul.f32 %v660, %v676
    %v700 = vmul.f32 %v661, %v676
    %v701 = vmul.f32 %v662, %v676
    %v702 = vmul.f32 %v663, %v676
    %v703 = vmul.f32 %v664, %v676
    %v704 = vmul.f32 %v665, %v676
    %v705 = vmul.f32 %v666, %v676
    %v706 = vmul.f32 %v667, %v676
    %v707 = vmul.f32 %v668, %v676
    %v708 = vmul.f32 %v669, %v676
    %v709 = vmul.f32 %v670, %v676
    %v710 = vld [vmem:[%s3] sm:$0x1]
    %v712 = vlaneseq
    %v713 = vshrl.u32 %v712, 7
    %v714 = vsub.s32 0, %v713
    %v715 = vrot.slane %v710, %v714
    %v717 = vadd.f32 %v678, %v715
    %v718 = vadd.f32 %v679, %v715
    %v719 = vadd.f32 %v680, %v715
    %v720 = vadd.f32 %v681, %v715
    %v721 = vadd.f32 %v682, %v715
    %v722 = vadd.f32 %v683, %v715
    %v723 = vadd.f32 %v684, %v715
    %v724 = vadd.f32 %v685, %v715
    %v725 = vadd.f32 %v686, %v715
    %v726 = vadd.f32 %v687, %v715
    %v727 = vadd.f32 %v688, %v715
    %v728 = vadd.f32 %v689, %v715
    %v729 = vadd.f32 %v690, %v715
    %v730 = vadd.f32 %v691, %v715
    %v731 = vadd.f32 %v692, %v715
    %v732 = vadd.f32 %v693, %v715
    %v733 = vadd.f32 %v694, %v715
    %v734 = vadd.f32 %v695, %v715
    %v735 = vadd.f32 %v696, %v715
    %v736 = vadd.f32 %v697, %v715
    %v737 = vadd.f32 %v698, %v715
    %v738 = vadd.f32 %v699, %v715
    %v739 = vadd.f32 %v700, %v715
    %v740 = vadd.f32 %v701, %v715
    %v741 = vadd.f32 %v702, %v715
    %v742 = vadd.f32 %v703, %v715
    %v743 = vadd.f32 %v704, %v715
    %v744 = vadd.f32 %v705, %v715
    %v745 = vadd.f32 %v706, %v715
    %v746 = vadd.f32 %v707, %v715
    %v747 = vadd.f32 %v708, %v715
    %v748 = vadd.f32 %v709, %v715
    %v749 = vmax.f32 %v717, 0.0
    %v750 = vmax.f32 %v718, 0.0
    %v751 = vmax.f32 %v719, 0.0
    %v752 = vmax.f32 %v720, 0.0
    %v753 = vmax.f32 %v721, 0.0
    %v754 = vmax.f32 %v722, 0.0
    %v755 = vmax.f32 %v723, 0.0
    %v756 = vmax.f32 %v724, 0.0
    %v757 = vmax.f32 %v725, 0.0
    %v758 = vmax.f32 %v726, 0.0
    %v759 = vmax.f32 %v727, 0.0
    %v760 = vmax.f32 %v728, 0.0
    %v761 = vmax.f32 %v729, 0.0
    %v762 = vmax.f32 %v730, 0.0
    %v763 = vmax.f32 %v731, 0.0
    %v764 = vmax.f32 %v732, 0.0
    %v765 = vmax.f32 %v733, 0.0
    %v766 = vmax.f32 %v734, 0.0
    %v767 = vmax.f32 %v735, 0.0
    %v768 = vmax.f32 %v736, 0.0
    %v769 = vmax.f32 %v737, 0.0
    %v770 = vmax.f32 %v738, 0.0
    %v771 = vmax.f32 %v739, 0.0
    %v772 = vmax.f32 %v740, 0.0
    %v773 = vmax.f32 %v741, 0.0
    %v774 = vmax.f32 %v742, 0.0
    %v775 = vmax.f32 %v743, 0.0
    %v776 = vmax.f32 %v744, 0.0
    %v777 = vmax.f32 %v745, 0.0
    %v778 = vmax.f32 %v746, 0.0
    %v779 = vmax.f32 %v747, 0.0
    %v780 = vmax.f32 %v748, 0.0
    %v781 = vpack.c.bf16 %v750, %v749
    %v782 = vpack.c.bf16 %v752, %v751
    %v783 = vpack.c.bf16 %v754, %v753
    %v784 = vpack.c.bf16 %v756, %v755
    %v785 = vpack.c.bf16 %v758, %v757
    %v786 = vpack.c.bf16 %v760, %v759
    %v787 = vpack.c.bf16 %v762, %v761
    %v788 = vpack.c.bf16 %v764, %v763
    %v789 = vpack.c.bf16 %v766, %v765
    %v790 = vpack.c.bf16 %v768, %v767
    %v791 = vpack.c.bf16 %v770, %v769
    %v792 = vpack.c.bf16 %v772, %v771
    %v793 = vpack.c.bf16 %v774, %v773
    %v794 = vpack.c.bf16 %v776, %v775
    %v795 = vpack.c.bf16 %v778, %v777
    %v796 = vpack.c.bf16 %v780, %v779
    %v813 = vunpack.c.l.b16 %v781
    %v814 = vunpack.c.h.b16 %v781
    %v815 = vunpack.c.l.b16 %v782
    %v816 = vunpack.c.h.b16 %v782
    %v817 = vunpack.c.l.b16 %v783
    %v818 = vunpack.c.h.b16 %v783
    %v819 = vunpack.c.l.b16 %v784
    %v820 = vunpack.c.h.b16 %v784
    %v821 = vunpack.c.l.b16 %v785
    %v822 = vunpack.c.h.b16 %v785
    %v823 = vunpack.c.l.b16 %v786
    %v824 = vunpack.c.h.b16 %v786
    %v825 = vunpack.c.l.b16 %v787
    %v826 = vunpack.c.h.b16 %v787
    %v827 = vunpack.c.l.b16 %v788
    %v828 = vunpack.c.h.b16 %v788
    %v829 = vunpack.c.l.b16 %v789
    %v830 = vunpack.c.h.b16 %v789
    %v831 = vunpack.c.l.b16 %v790
    %v832 = vunpack.c.h.b16 %v790
    %v833 = vunpack.c.l.b16 %v791
    %v834 = vunpack.c.h.b16 %v791
    %v835 = vunpack.c.l.b16 %v792
    %v836 = vunpack.c.h.b16 %v792
    %v837 = vunpack.c.l.b16 %v793
    %v838 = vunpack.c.h.b16 %v793
    %v839 = vunpack.c.l.b16 %v794
    %v840 = vunpack.c.h.b16 %v794
    %v841 = vunpack.c.l.b16 %v795
    %v842 = vunpack.c.h.b16 %v795
    %v843 = vunpack.c.l.b16 %v796
    %v844 = vunpack.c.h.b16 %v796
    %v845 = vpack.c.b16 %v813, %v813
    %v846 = vpack.c.b16 %v814, %v814
    %v847 = vpack.c.b16 %v815, %v815
    %v848 = vpack.c.b16 %v816, %v816
    %v849 = vpack.c.b16 %v817, %v817
    %v850 = vpack.c.b16 %v818, %v818
    %v851 = vpack.c.b16 %v819, %v819
    %v852 = vpack.c.b16 %v820, %v820
    %v853 = vpack.c.b16 %v821, %v821
    %v854 = vpack.c.b16 %v822, %v822
    %v855 = vpack.c.b16 %v823, %v823
    %v856 = vpack.c.b16 %v824, %v824
    %v857 = vpack.c.b16 %v825, %v825
    %v858 = vpack.c.b16 %v826, %v826
    %v859 = vpack.c.b16 %v827, %v827
    %v860 = vpack.c.b16 %v828, %v828
    %v861 = vpack.c.b16 %v829, %v829
    %v862 = vpack.c.b16 %v830, %v830
    %v863 = vpack.c.b16 %v831, %v831
    %v864 = vpack.c.b16 %v832, %v832
    %v865 = vpack.c.b16 %v833, %v833
    %v866 = vpack.c.b16 %v834, %v834
    %v867 = vpack.c.b16 %v835, %v835
    %v868 = vpack.c.b16 %v836, %v836
    %v869 = vpack.c.b16 %v837, %v837
    %v870 = vpack.c.b16 %v838, %v838
    %v871 = vpack.c.b16 %v839, %v839
    %v872 = vpack.c.b16 %v840, %v840
    %v873 = vpack.c.b16 %v841, %v841
    %v874 = vpack.c.b16 %v842, %v842
    %v875 = vpack.c.b16 %v843, %v843
    %v876 = vpack.c.b16 %v844, %v844
    %909 = vst [vmem:[%s4] sm:$0xf] %v845
    %910 = vst [vmem:[%s4 + $0x4] sm:$0xf] %v846
    %911 = vst [vmem:[%s4 + $0x8] sm:$0xf] %v847
    %912 = vst [vmem:[%s4 + $0xc] sm:$0xf] %v848
    %913 = vst [vmem:[%s4 + $0x10] sm:$0xf] %v849
    %914 = vst [vmem:[%s4 + $0x14] sm:$0xf] %v850
    %915 = vst [vmem:[%s4 + $0x18] sm:$0xf] %v851
    %916 = vst [vmem:[%s4 + $0x1c] sm:$0xf] %v852
    %917 = vst [vmem:[%s4 + $0x20] sm:$0xf] %v853
    %918 = vst [vmem:[%s4 + $0x24] sm:$0xf] %v854
    %919 = vst [vmem:[%s4 + $0x28] sm:$0xf] %v855
    %920 = vst [vmem:[%s4 + $0x2c] sm:$0xf] %v856
    %921 = vst [vmem:[%s4 + $0x30] sm:$0xf] %v857
    %922 = vst [vmem:[%s4 + $0x34] sm:$0xf] %v858
    %923 = vst [vmem:[%s4 + $0x38] sm:$0xf] %v859
    %924 = vst [vmem:[%s4 + $0x3c] sm:$0xf] %v860
    %925 = vst [vmem:[%s4 + $0x40] sm:$0xf] %v861
    %926 = vst [vmem:[%s4 + $0x44] sm:$0xf] %v862
    %927 = vst [vmem:[%s4 + $0x48] sm:$0xf] %v863
    %928 = vst [vmem:[%s4 + $0x4c] sm:$0xf] %v864
    %929 = vst [vmem:[%s4 + $0x50] sm:$0xf] %v865
    %930 = vst [vmem:[%s4 + $0x54] sm:$0xf] %v866
    %931 = vst [vmem:[%s4 + $0x58] sm:$0xf] %v867
    %932 = vst [vmem:[%s4 + $0x5c] sm:$0xf] %v868
    %933 = vst [vmem:[%s4 + $0x60] sm:$0xf] %v869
    %934 = vst [vmem:[%s4 + $0x64] sm:$0xf] %v870
    %935 = vst [vmem:[%s4 + $0x68] sm:$0xf] %v871
    %936 = vst [vmem:[%s4 + $0x6c] sm:$0xf] %v872
    %937 = vst [vmem:[%s4 + $0x70] sm:$0xf] %v873
    %938 = vst [vmem:[%s4 + $0x74] sm:$0xf] %v874
    %939 = vst [vmem:[%s4 + $0x78] sm:$0xf] %v875
    %940 = vst [vmem:[%s4 + $0x7c] sm:$0xf] %v876
  $region25: #{graph_feature_encoder.3} parent=0 // pred_fallthru
    _
  // Predicated region
  $region26: #{graph_feature_encoder.3} parent=0 // pred_check
    _
  $region27: #{graph_feature_encoder.3} parent=0 // pred_check_branch
    %942 = sbr.rel (0) target = $region29
  $region28: #{graph_feature_encoder.3} parent=0 // pred_region
    _
  $region29: #{graph_feature_encoder.3} parent=0 // pred_fallthru
    _
  // Predicated region
  $region30: #{graph_feature_encoder.3} parent=0 // pred_check
    _
  $region31: #{graph_feature_encoder.3} parent=0 // pred_check_branch
    %944 = sbr.rel (0) target = $region33
  $region32: #{graph_feature_encoder.3} parent=0 // pred_region
    _
  $region33: #{graph_feature_encoder.3} parent=0 // pred_fallthru
    _

// kernel: graph_feature_encoder.5
$region0: #{graph_feature_encoder.5}
  #allocation0 [shape = 'u32[]', space=smem, size = 0x4, offset = 0x4, fixed_abs, tag = 'smem constant byte address 0x4 - core index']
  #allocation1 [shape = 'u32[144,128]{1,0:T(1,128)}', space=vmem, size = 0x12000, scoped, tag = 'internal scratch']
  #allocation2 [shape = 'f32[256,128]{1,0:T(8,128)}', space=vmem, size = 0x20000, scoped, tag = 'scratch operand']
  %s0 = inlined_call_operand.vmem [shape: bf16[256,256], index: 0, kind: input, shape index: {}]
  %s1 = inlined_call_operand.vmem [shape: bf16[256,128], index: 1, kind: input, shape index: {}]
  %s2 = inlined_call_operand.vmem [shape: f32[1,128], index: 2, kind: input, shape index: {}]
  %s3 = inlined_call_operand.vmem [shape: f32[1,128], index: 3, kind: input, shape index: {}]
  %s4 = inlined_call_operand.vmem [shape: f32[256,128], index: 4, kind: output, shape index: {}]
  %s5 = sld [smem:[#allocation0]]
  $region34: #{graph_feature_encoder.5} parent=0
    _
  %s7 = ssub.s32 1, %s5
  %s8 = scalar_select 0, %s7, %s5
  // Predicated region
  $region2: #{graph_feature_encoder.5} parent=0 // pred_check
    _
  $region3: #{graph_feature_encoder.5} parent=0 // pred_check_branch
    %10 = sbr.rel (0) target = $region5
  $region4: #{graph_feature_encoder.5} parent=0 // pred_region
    _
  $region5: #{graph_feature_encoder.5} parent=0 // pred_fallthru
    _
  // Predicated region
  $region6: #{graph_feature_encoder.5} parent=0 // pred_check
    _
  $region7: #{graph_feature_encoder.5} parent=0 // pred_check_branch
    %12 = sbr.rel (0) target = $region9
  $region8: #{graph_feature_encoder.5} parent=0 // pred_region
    _
  $region9: #{graph_feature_encoder.5} parent=0 // pred_fallthru
    _
  // Predicated region
  $region10: #{graph_feature_encoder.5} parent=0 // pred_check
    _
  $region11: #{graph_feature_encoder.5} parent=0 // pred_check_branch
    %14 = sbr.rel (0) target = $region13
  $region12: #{graph_feature_encoder.5} parent=0 // pred_region
    _
  $region13: #{graph_feature_encoder.5} parent=0 // pred_fallthru
    _
  // Predicated region
  $region14: #{graph_feature_encoder.5} parent=0 // pred_check
    _
  $region15: #{graph_feature_encoder.5} parent=0 // pred_check_branch
    %16 = sbr.rel (0) target = $region17
  $region16: #{graph_feature_encoder.5} parent=0 // pred_region
    _
  $region17: #{graph_feature_encoder.5} parent=0 // pred_fallthru
    _
  %p18 = scmp.eq.s32.totalorder 0, 0
  // Predicated region
  $region18: #{graph_feature_encoder.5} parent=0 // pred_check
    %p19 = pneg %p18
  $region19: #{graph_feature_encoder.5} parent=0 // pred_check_branch
    %21 = sbr.rel (%p19) target = $region21
  $region20: #{graph_feature_encoder.5} parent=0 // pred_region
    %22 = vst [vmem:[#allocation2] sm:$0xff] 0.0
    %23 = vst [vmem:[#allocation2 + $0x8] sm:$0xff] 0.0
    %24 = vst [vmem:[#allocation2 + $0x10] sm:$0xff] 0.0
    %25 = vst [vmem:[#allocation2 + $0x18] sm:$0xff] 0.0
    %26 = vst [vmem:[#allocation2 + $0x20] sm:$0xff] 0.0
    %27 = vst [vmem:[#allocation2 + $0x28] sm:$0xff] 0.0
    %28 = vst [vmem:[#allocation2 + $0x30] sm:$0xff] 0.0
    %29 = vst [vmem:[#allocation2 + $0x38] sm:$0xff] 0.0
    %30 = vst [vmem:[#allocation2 + $0x40] sm:$0xff] 0.0
    %31 = vst [vmem:[#allocation2 + $0x48] sm:$0xff] 0.0
    %32 = vst [vmem:[#allocation2 + $0x50] sm:$0xff] 0.0
    %33 = vst [vmem:[#allocation2 + $0x58] sm:$0xff] 0.0
    %34 = vst [vmem:[#allocation2 + $0x60] sm:$0xff] 0.0
    %35 = vst [vmem:[#allocation2 + $0x68] sm:$0xff] 0.0
    %36 = vst [vmem:[#allocation2 + $0x70] sm:$0xff] 0.0
    %37 = vst [vmem:[#allocation2 + $0x78] sm:$0xff] 0.0
    %38 = vst [vmem:[#allocation2 + $0x80] sm:$0xff] 0.0
    %39 = vst [vmem:[#allocation2 + $0x88] sm:$0xff] 0.0
    %40 = vst [vmem:[#allocation2 + $0x90] sm:$0xff] 0.0
    %41 = vst [vmem:[#allocation2 + $0x98] sm:$0xff] 0.0
    %42 = vst [vmem:[#allocation2 + $0xa0] sm:$0xff] 0.0
    %43 = vst [vmem:[#allocation2 + $0xa8] sm:$0xff] 0.0
    %44 = vst [vmem:[#allocation2 + $0xb0] sm:$0xff] 0.0
    %45 = vst [vmem:[#allocation2 + $0xb8] sm:$0xff] 0.0
    %46 = vst [vmem:[#allocation2 + $0xc0] sm:$0xff] 0.0
    %47 = vst [vmem:[#allocation2 + $0xc8] sm:$0xff] 0.0
    %48 = vst [vmem:[#allocation2 + $0xd0] sm:$0xff] 0.0
    %49 = vst [vmem:[#allocation2 + $0xd8] sm:$0xff] 0.0
    %50 = vst [vmem:[#allocation2 + $0xe0] sm:$0xff] 0.0
    %51 = vst [vmem:[#allocation2 + $0xe8] sm:$0xff] 0.0
    %52 = vst [vmem:[#allocation2 + $0xf0] sm:$0xff] 0.0
    %53 = vst [vmem:[#allocation2 + $0xf8] sm:$0xff] 0.0
  $region21: #{graph_feature_encoder.5} parent=0 // pred_fallthru
    _
  %s54 = smul.u32 0, 256
  %s55 = sshra.s32 %s54, 3
  %s56 = sand.u32 %s54, 7
  %s57 = smul.addr %s55, 4
  %s58 = scalar_lea.vmem %s1, %s57
  %v59 = vld [vmem:[%s58] sm:$0xf]
  %v60 = vld [vmem:[%s58 + $0x4] sm:$0xf]
  %v61 = vld [vmem:[%s58 + $0x8] sm:$0xf]
  %v62 = vld [vmem:[%s58 + $0xc] sm:$0xf]
  %v63 = vld [vmem:[%s58 + $0x10] sm:$0xf]
  %v64 = vld [vmem:[%s58 + $0x14] sm:$0xf]
  %v65 = vld [vmem:[%s58 + $0x18] sm:$0xf]
  %v66 = vld [vmem:[%s58 + $0x1c] sm:$0xf]
  %v67 = vld [vmem:[%s58 + $0x20] sm:$0xf]
  %v68 = vld [vmem:[%s58 + $0x24] sm:$0xf]
  %v69 = vld [vmem:[%s58 + $0x28] sm:$0xf]
  %v70 = vld [vmem:[%s58 + $0x2c] sm:$0xf]
  %v71 = vld [vmem:[%s58 + $0x30] sm:$0xf]
  %v72 = vld [vmem:[%s58 + $0x34] sm:$0xf]
  %v73 = vld [vmem:[%s58 + $0x38] sm:$0xf]
  %v74 = vld [vmem:[%s58 + $0x3c] sm:$0xf]
  %v75 = vld [vmem:[%s58 + $0x40] sm:$0xf]
  %v76 = vld [vmem:[%s58 + $0x44] sm:$0xf]
  %v77 = vld [vmem:[%s58 + $0x48] sm:$0xf]
  %v78 = vld [vmem:[%s58 + $0x4c] sm:$0xf]
  %v79 = vld [vmem:[%s58 + $0x50] sm:$0xf]
  %v80 = vld [vmem:[%s58 + $0x54] sm:$0xf]
  %v81 = vld [vmem:[%s58 + $0x58] sm:$0xf]
  %v82 = vld [vmem:[%s58 + $0x5c] sm:$0xf]
  %v83 = vld [vmem:[%s58 + $0x60] sm:$0xf]
  %v84 = vld [vmem:[%s58 + $0x64] sm:$0xf]
  %v85 = vld [vmem:[%s58 + $0x68] sm:$0xf]
  %v86 = vld [vmem:[%s58 + $0x6c] sm:$0xf]
  %v87 = vld [vmem:[%s58 + $0x70] sm:$0xf]
  %v88 = vld [vmem:[%s58 + $0x74] sm:$0xf]
  %v89 = vld [vmem:[%s58 + $0x78] sm:$0xf]
  %v90 = vld [vmem:[%s58 + $0x7c] sm:$0xf]
  %v91 = vld [vmem:[#allocation2] sm:$0xff]
  %v92 = vld [vmem:[#allocation2 + $0x8] sm:$0xff]
  %v93 = vld [vmem:[#allocation2 + $0x10] sm:$0xff]
  %v94 = vld [vmem:[#allocation2 + $0x18] sm:$0xff]
  %v95 = vld [vmem:[#allocation2 + $0x20] sm:$0xff]
  %v96 = vld [vmem:[#allocation2 + $0x28] sm:$0xff]
  %v97 = vld [vmem:[#allocation2 + $0x30] sm:$0xff]
  %v98 = vld [vmem:[#allocation2 + $0x38] sm:$0xff]
  %v99 = vld [vmem:[#allocation2 + $0x40] sm:$0xff]
  %v100 = vld [vmem:[#allocation2 + $0x48] sm:$0xff]
  %v101 = vld [vmem:[#allocation2 + $0x50] sm:$0xff]
  %v102 = vld [vmem:[#allocation2 + $0x58] sm:$0xff]
  %v103 = vld [vmem:[#allocation2 + $0x60] sm:$0xff]
  %v104 = vld [vmem:[#allocation2 + $0x68] sm:$0xff]
  %v105 = vld [vmem:[#allocation2 + $0x70] sm:$0xff]
  %v106 = vld [vmem:[#allocation2 + $0x78] sm:$0xff]
  %v107 = vld [vmem:[#allocation2 + $0x80] sm:$0xff]
  %v108 = vld [vmem:[#allocation2 + $0x88] sm:$0xff]
  %v109 = vld [vmem:[#allocation2 + $0x90] sm:$0xff]
  %v110 = vld [vmem:[#allocation2 + $0x98] sm:$0xff]
  %v111 = vld [vmem:[#allocation2 + $0xa0] sm:$0xff]
  %v112 = vld [vmem:[#allocation2 + $0xa8] sm:$0xff]
  %v113 = vld [vmem:[#allocation2 + $0xb0] sm:$0xff]
  %v114 = vld [vmem:[#allocation2 + $0xb8] sm:$0xff]
  %v115 = vld [vmem:[#allocation2 + $0xc0] sm:$0xff]
  %v116 = vld [vmem:[#allocation2 + $0xc8] sm:$0xff]
  %v117 = vld [vmem:[#allocation2 + $0xd0] sm:$0xff]
  %v118 = vld [vmem:[#allocation2 + $0xd8] sm:$0xff]
  %v119 = vld [vmem:[#allocation2 + $0xe0] sm:$0xff]
  %v120 = vld [vmem:[#allocation2 + $0xe8] sm:$0xff]
  %v121 = vld [vmem:[#allocation2 + $0xf0] sm:$0xff]
  %v122 = vld [vmem:[#allocation2 + $0xf8] sm:$0xff]
  %v123 = vld [vmem:[%s0] sm:$0xff]
  %v124 = vld [vmem:[%s0 + $0x8] sm:$0xff]
  %v125 = vld [vmem:[%s0 + $0x10] sm:$0xff]
  %v126 = vld [vmem:[%s0 + $0x18] sm:$0xff]
  %v127 = vld [vmem:[%s0 + $0x20] sm:$0xff]
  %v128 = vld [vmem:[%s0 + $0x28] sm:$0xff]
  %v129 = vld [vmem:[%s0 + $0x30] sm:$0xff]
  %v130 = vld [vmem:[%s0 + $0x38] sm:$0xff]
  %v131 = vld [vmem:[%s0 + $0x40] sm:$0xff]
  %v132 = vld [vmem:[%s0 + $0x48] sm:$0xff]
  %v133 = vld [vmem:[%s0 + $0x50] sm:$0xff]
  %v134 = vld [vmem:[%s0 + $0x58] sm:$0xff]
  %v135 = vld [vmem:[%s0 + $0x60] sm:$0xff]
  %v136 = vld [vmem:[%s0 + $0x68] sm:$0xff]
  %v137 = vld [vmem:[%s0 + $0x70] sm:$0xff]
  %v138 = vld [vmem:[%s0 + $0x78] sm:$0xff]
  %v139 = vld [vmem:[%s0 + $0x80] sm:$0xff]
  %v140 = vld [vmem:[%s0 + $0x88] sm:$0xff]
  %v141 = vld [vmem:[%s0 + $0x90] sm:$0xff]
  %v142 = vld [vmem:[%s0 + $0x98] sm:$0xff]
  %v143 = vld [vmem:[%s0 + $0xa0] sm:$0xff]
  %v144 = vld [vmem:[%s0 + $0xa8] sm:$0xff]
  %v145 = vld [vmem:[%s0 + $0xb0] sm:$0xff]
  %v146 = vld [vmem:[%s0 + $0xb8] sm:$0xff]
  %v147 = vld [vmem:[%s0 + $0xc0] sm:$0xff]
  %v148 = vld [vmem:[%s0 + $0xc8] sm:$0xff]
  %v149 = vld [vmem:[%s0 + $0xd0] sm:$0xff]
  %v150 = vld [vmem:[%s0 + $0xd8] sm:$0xff]
  %v151 = vld [vmem:[%s0 + $0xe0] sm:$0xff]
  %v152 = vld [vmem:[%s0 + $0xe8] sm:$0xff]
  %v153 = vld [vmem:[%s0 + $0xf0] sm:$0xff]
  %v154 = vld [vmem:[%s0 + $0xf8] sm:$0xff]
  %v187 = vunpack.c.l.b16 %v123
  %v188 = vunpack.c.h.b16 %v123
  %v189 = vunpack.c.l.b16 %v124
  %v190 = vunpack.c.h.b16 %v124
  %v191 = vunpack.c.l.b16 %v125
  %v192 = vunpack.c.h.b16 %v125
  %v193 = vunpack.c.l.b16 %v126
  %v194 = vunpack.c.h.b16 %v126
  %v195 = vunpack.c.l.b16 %v127
  %v196 = vunpack.c.h.b16 %v127
  %v197 = vunpack.c.l.b16 %v128
  %v198 = vunpack.c.h.b16 %v128
  %v199 = vunpack.c.l.b16 %v129
  %v200 = vunpack.c.h.b16 %v129
  %v201 = vunpack.c.l.b16 %v130
  %v202 = vunpack.c.h.b16 %v130
  %v203 = vunpack.c.l.b16 %v131
  %v204 = vunpack.c.h.b16 %v131
  %v205 = vunpack.c.l.b16 %v132
  %v206 = vunpack.c.h.b16 %v132
  %v207 = vunpack.c.l.b16 %v133
  %v208 = vunpack.c.h.b16 %v133
  %v209 = vunpack.c.l.b16 %v134
  %v210 = vunpack.c.h.b16 %v134
  %v211 = vunpack.c.l.b16 %v135
  %v212 = vunpack.c.h.b16 %v135
  %v213 = vunpack.c.l.b16 %v136
  %v214 = vunpack.c.h.b16 %v136
  %v215 = vunpack.c.l.b16 %v137
  %v216 = vunpack.c.h.b16 %v137
  %v217 = vunpack.c.l.b16 %v138
  %v218 = vunpack.c.h.b16 %v138
  %v219 = vunpack.c.l.b16 %v139
  %v220 = vunpack.c.h.b16 %v139
  %v221 = vunpack.c.l.b16 %v140
  %v222 = vunpack.c.h.b16 %v140
  %v223 = vunpack.c.l.b16 %v141
  %v224 = vunpack.c.h.b16 %v141
  %v225 = vunpack.c.l.b16 %v142
  %v226 = vunpack.c.h.b16 %v142
  %v227 = vunpack.c.l.b16 %v143
  %v228 = vunpack.c.h.b16 %v143
  %v229 = vunpack.c.l.b16 %v144
  %v230 = vunpack.c.h.b16 %v144
  %v231 = vunpack.c.l.b16 %v145
  %v232 = vunpack.c.h.b16 %v145
  %v233 = vunpack.c.l.b16 %v146
  %v234 = vunpack.c.h.b16 %v146
  %v235 = vunpack.c.l.b16 %v147
  %v236 = vunpack.c.h.b16 %v147
  %v237 = vunpack.c.l.b16 %v148
  %v238 = vunpack.c.h.b16 %v148
  %v239 = vunpack.c.l.b16 %v149
  %v240 = vunpack.c.h.b16 %v149
  %v241 = vunpack.c.l.b16 %v150
  %v242 = vunpack.c.h.b16 %v150
  %v243 = vunpack.c.l.b16 %v151
  %v244 = vunpack.c.h.b16 %v151
  %v245 = vunpack.c.l.b16 %v152
  %v246 = vunpack.c.h.b16 %v152
  %v247 = vunpack.c.l.b16 %v153
  %v248 = vunpack.c.h.b16 %v153
  %v249 = vunpack.c.l.b16 %v154
  %v250 = vunpack.c.h.b16 %v154
  %v251 = vpack.c.b16 %v189, %v187
  %v252 = vpack.c.b16 %v190, %v188
  %v253 = vpack.c.b16 %v193, %v191
  %v254 = vpack.c.b16 %v194, %v192
  %v255 = vpack.c.b16 %v197, %v195
  %v256 = vpack.c.b16 %v198, %v196
  %v257 = vpack.c.b16 %v201, %v199
  %v258 = vpack.c.b16 %v202, %v200
  %v259 = vpack.c.b16 %v205, %v203
  %v260 = vpack.c.b16 %v206, %v204
  %v261 = vpack.c.b16 %v209, %v207
  %v262 = vpack.c.b16 %v210, %v208
  %v263 = vpack.c.b16 %v213, %v211
  %v264 = vpack.c.b16 %v214, %v212
  %v265 = vpack.c.b16 %v217, %v215
  %v266 = vpack.c.b16 %v218, %v216
  %v267 = vpack.c.b16 %v221, %v219
  %v268 = vpack.c.b16 %v222, %v220
  %v269 = vpack.c.b16 %v225, %v223
  %v270 = vpack.c.b16 %v226, %v224
  %v271 = vpack.c.b16 %v229, %v227
  %v272 = vpack.c.b16 %v230, %v228
  %v273 = vpack.c.b16 %v233, %v231
  %v274 = vpack.c.b16 %v234, %v232
  %v275 = vpack.c.b16 %v237, %v235
  %v276 = vpack.c.b16 %v238, %v236
  %v277 = vpack.c.b16 %v241, %v239
  %v278 = vpack.c.b16 %v242, %v240
  %v279 = vpack.c.b16 %v245, %v243
  %v280 = vpack.c.b16 %v246, %v244
  %v281 = vpack.c.b16 %v249, %v247
  %v282 = vpack.c.b16 %v250, %v248
  %v347 = vunpack.c.l.b16 %v59
  %v348 = vunpack.c.l.b16 %v60
  %v349 = vunpack.c.l.b16 %v61
  %v350 = vunpack.c.l.b16 %v62
  %v351 = vunpack.c.l.b16 %v63
  %v352 = vunpack.c.l.b16 %v64
  %v353 = vunpack.c.l.b16 %v65
  %v354 = vunpack.c.l.b16 %v66
  %v355 = vunpack.c.l.b16 %v67
  %v356 = vunpack.c.l.b16 %v68
  %v357 = vunpack.c.l.b16 %v69
  %v358 = vunpack.c.l.b16 %v70
  %v359 = vunpack.c.l.b16 %v71
  %v360 = vunpack.c.l.b16 %v72
  %v361 = vunpack.c.l.b16 %v73
  %v362 = vunpack.c.l.b16 %v74
  %v363 = vunpack.c.l.b16 %v75
  %v364 = vunpack.c.l.b16 %v76
  %v365 = vunpack.c.l.b16 %v77
  %v366 = vunpack.c.l.b16 %v78
  %v367 = vunpack.c.l.b16 %v79
  %v368 = vunpack.c.l.b16 %v80
  %v369 = vunpack.c.l.b16 %v81
  %v370 = vunpack.c.l.b16 %v82
  %v371 = vunpack.c.l.b16 %v83
  %v372 = vunpack.c.l.b16 %v84
  %v373 = vunpack.c.l.b16 %v85
  %v374 = vunpack.c.l.b16 %v86
  %v375 = vunpack.c.l.b16 %v87
  %v376 = vunpack.c.l.b16 %v88
  %v377 = vunpack.c.l.b16 %v89
  %v378 = vunpack.c.l.b16 %v90
  %v379 = vpack.c.b16 %v348, %v347
  %v380 = vpack.c.b16 %v350, %v349
  %v381 = vpack.c.b16 %v352, %v351
  %v382 = vpack.c.b16 %v354, %v353
  %v383 = vpack.c.b16 %v356, %v355
  %v384 = vpack.c.b16 %v358, %v357
  %v385 = vpack.c.b16 %v360, %v359
  %v386 = vpack.c.b16 %v362, %v361
  %v387 = vpack.c.b16 %v364, %v363
  %v388 = vpack.c.b16 %v366, %v365
  %v389 = vpack.c.b16 %v368, %v367
  %v390 = vpack.c.b16 %v370, %v369
  %v391 = vpack.c.b16 %v372, %v371
  %v392 = vpack.c.b16 %v374, %v373
  %v393 = vpack.c.b16 %v376, %v375
  %v394 = vpack.c.b16 %v378, %v377
  %411 = vmatprep.subr.bf16.mxu0 0
  %412 = vmatpush1.bf16.msra.mxu0 %v386
  %413 = vmatprep.subr.bf16.mxu0 0
  %414 = vmatpush1.bf16.msra.mxu0 %v385
  %415 = vmatprep.subr.bf16.mxu0 0
  %416 = vmatpush1.bf16.msra.mxu0 %v384
  %417 = vmatprep.subr.bf16.mxu0 0
  %418 = vmatpush1.bf16.msra.mxu0 %v383
  %419 = vmatprep.subr.bf16.mxu0 0
  %420 = vmatpush1.bf16.msra.mxu0 %v382
  %421 = vmatprep.subr.bf16.mxu0 0
  %422 = vmatpush1.bf16.msra.mxu0 %v381
  %423 = vmatprep.subr.bf16.mxu0 0
  %424 = vmatpush1.bf16.msra.mxu0 %v380
  %425 = vmatprep.subr.bf16.mxu0 0
  %426 = vmatpush1.bf16.msra.mxu0 %v379
  %427 = vmatprep.subr.bf16.mxu0 0
  %428 = vmatpush2.bf16.msra.mxu0 %v394
  %429 = vmatprep.subr.bf16.mxu0 0
  %430 = vmatpush2.bf16.msra.mxu0 %v393
  %431 = vmatprep.subr.bf16.mxu0 0
  %432 = vmatpush2.bf16.msra.mxu0 %v392
  %433 = vmatprep.subr.bf16.mxu0 0
  %434 = vmatpush2.bf16.msra.mxu0 %v391
  %435 = vmatprep.subr.bf16.mxu0 0
  %436 = vmatpush2.bf16.msra.mxu0 %v390
  %437 = vmatprep.subr.bf16.mxu0 0
  %438 = vmatpush2.bf16.msra.mxu0 %v389
  %439 = vmatprep.subr.bf16.mxu0 0
  %440 = vmatpush2.bf16.msra.mxu0 %v388
  %441 = vmatprep.subr.bf16.mxu0 0
  %442 = vmatpush2.bf16.msra.mxu0 %v387
  %443 = vmatprep.mubr.bf16.mxu0 %v252
  %444 = vmatmul.mubr.bf16.gmra.mxu0 %v251
  %v445 = vpop.f32.mrf.mxu0
  %v446 = vadd.f32 0.0, %v445
  %v447 = vpop.f32.mrf.mxu0
  %v448 = vpop.f32.mrf.mxu0
  %v449 = vadd.f32 0.0, %v448
  %v450 = vpop.f32.mrf.mxu0
  %451 = vmatprep.mubr.bf16.mxu0 %v254
  %452 = vmatmul.mubr.bf16.gmra.mxu0 %v253
  %v453 = vpop.f32.mrf.mxu0
  %v454 = vadd.f32 0.0, %v453
  %v455 = vpop.f32.mrf.mxu0
  %v456 = vpop.f32.mrf.mxu0
  %v457 = vadd.f32 0.0, %v456
  %v458 = vpop.f32.mrf.mxu0
  %459 = vmatprep.mubr.bf16.mxu0 %v256
  %460 = vmatmul.mubr.bf16.gmra.mxu0 %v255
  %v461 = vpop.f32.mrf.mxu0
  %v462 = vadd.f32 0.0, %v461
  %v463 = vpop.f32.mrf.mxu0
  %v464 = vpop.f32.mrf.mxu0
  %v465 = vadd.f32 0.0, %v464
  %v466 = vpop.f32.mrf.mxu0
  %467 = vmatprep.mubr.bf16.mxu0 %v258
  %468 = vmatmul.mubr.bf16.gmra.mxu0 %v257
  %v469 = vpop.f32.mrf.mxu0
  %v470 = vadd.f32 0.0, %v469
  %v471 = vpop.f32.mrf.mxu0
  %v472 = vpop.f32.mrf.mxu0
  %v473 = vadd.f32 0.0, %v472
  %v474 = vpop.f32.mrf.mxu0
  %475 = vmatprep.mubr.bf16.mxu0 %v260
  %476 = vmatmul.mubr.bf16.gmra.mxu0 %v259
  %v477 = vpop.f32.mrf.mxu0
  %v478 = vadd.f32 0.0, %v477
  %v479 = vpop.f32.mrf.mxu0
  %v480 = vpop.f32.mrf.mxu0
  %v481 = vadd.f32 0.0, %v480
  %v482 = vpop.f32.mrf.mxu0
  %483 = vmatprep.mubr.bf16.mxu0 %v262
  %484 = vmatmul.mubr.bf16.gmra.mxu0 %v261
  %v485 = vpop.f32.mrf.mxu0
  %v486 = vadd.f32 0.0, %v485
  %v487 = vpop.f32.mrf.mxu0
  %v488 = vpop.f32.mrf.mxu0
  %v489 = vadd.f32 0.0, %v488
  %v490 = vpop.f32.mrf.mxu0
  %491 = vmatprep.mubr.bf16.mxu0 %v264
  %492 = vmatmul.mubr.bf16.gmra.mxu0 %v263
  %v493 = vpop.f32.mrf.mxu0
  %v494 = vadd.f32 0.0, %v493
  %v495 = vpop.f32.mrf.mxu0
  %v496 = vpop.f32.mrf.mxu0
  %v497 = vadd.f32 0.0, %v496
  %v498 = vpop.f32.mrf.mxu0
  %499 = vmatprep.mubr.bf16.mxu0 %v266
  %500 = vmatmul.mubr.bf16.gmra.mxu0 %v265
  %v501 = vpop.f32.mrf.mxu0
  %v502 = vadd.f32 0.0, %v501
  %v503 = vpop.f32.mrf.mxu0
  %v504 = vpop.f32.mrf.mxu0
  %v505 = vadd.f32 0.0, %v504
  %v506 = vpop.f32.mrf.mxu0
  %507 = vmatprep.mubr.bf16.mxu0 %v268
  %508 = vmatmul.mubr.bf16.gmra.mxu0 %v267
  %v509 = vpop.f32.mrf.mxu0
  %v510 = vadd.f32 0.0, %v509
  %v511 = vpop.f32.mrf.mxu0
  %v512 = vpop.f32.mrf.mxu0
  %v513 = vadd.f32 0.0, %v512
  %v514 = vpop.f32.mrf.mxu0
  %515 = vmatprep.mubr.bf16.mxu0 %v270
  %516 = vmatmul.mubr.bf16.gmra.mxu0 %v269
  %v517 = vpop.f32.mrf.mxu0
  %v518 = vadd.f32 0.0, %v517
  %v519 = vpop.f32.mrf.mxu0
  %v520 = vpop.f32.mrf.mxu0
  %v521 = vadd.f32 0.0, %v520
  %v522 = vpop.f32.mrf.mxu0
  %523 = vmatprep.mubr.bf16.mxu0 %v272
  %524 = vmatmul.mubr.bf16.gmra.mxu0 %v271
  %v525 = vpop.f32.mrf.mxu0
  %v526 = vadd.f32 0.0, %v525
  %v527 = vpop.f32.mrf.mxu0
  %v528 = vpop.f32.mrf.mxu0
  %v529 = vadd.f32 0.0, %v528
  %v530 = vpop.f32.mrf.mxu0
  %531 = vmatprep.mubr.bf16.mxu0 %v274
  %532 = vmatmul.mubr.bf16.gmra.mxu0 %v273
  %v533 = vpop.f32.mrf.mxu0
  %v534 = vadd.f32 0.0, %v533
  %v535 = vpop.f32.mrf.mxu0
  %v536 = vpop.f32.mrf.mxu0
  %v537 = vadd.f32 0.0, %v536
  %v538 = vpop.f32.mrf.mxu0
  %539 = vmatprep.mubr.bf16.mxu0 %v276
  %540 = vmatmul.mubr.bf16.gmra.mxu0 %v275
  %v541 = vpop.f32.mrf.mxu0
  %v542 = vadd.f32 0.0, %v541
  %v543 = vpop.f32.mrf.mxu0
  %v544 = vpop.f32.mrf.mxu0
  %v545 = vadd.f32 0.0, %v544
  %v546 = vpop.f32.mrf.mxu0
  %547 = vmatprep.mubr.bf16.mxu0 %v278
  %548 = vmatmul.mubr.bf16.gmra.mxu0 %v277
  %v549 = vpop.f32.mrf.mxu0
  %v550 = vadd.f32 0.0, %v549
  %v551 = vpop.f32.mrf.mxu0
  %v552 = vpop.f32.mrf.mxu0
  %v553 = vadd.f32 0.0, %v552
  %v554 = vpop.f32.mrf.mxu0
  %555 = vmatprep.mubr.bf16.mxu0 %v280
  %556 = vmatmul.mubr.bf16.gmra.mxu0 %v279
  %v557 = vpop.f32.mrf.mxu0
  %v558 = vadd.f32 0.0, %v557
  %v559 = vpop.f32.mrf.mxu0
  %v560 = vpop.f32.mrf.mxu0
  %v561 = vadd.f32 0.0, %v560
  %v562 = vpop.f32.mrf.mxu0
  %563 = vmatprep.mubr.bf16.mxu0 %v282
  %564 = vmatmul.mubr.bf16.gmra.mxu0 %v281
  %v565 = vpop.f32.mrf.mxu0
  %v566 = vadd.f32 0.0, %v565
  %v567 = vpop.f32.mrf.mxu0
  %v568 = vpop.f32.mrf.mxu0
  %v569 = vadd.f32 0.0, %v568
  %v570 = vpop.f32.mrf.mxu0
  %571 = vdwg.mxu0
  %v572 = vadd.f32 %v91, %v446
  %v573 = vadd.f32 %v92, %v449
  %v574 = vadd.f32 %v93, %v454
  %v575 = vadd.f32 %v94, %v457
  %v576 = vadd.f32 %v95, %v462
  %v577 = vadd.f32 %v96, %v465
  %v578 = vadd.f32 %v97, %v470
  %v579 = vadd.f32 %v98, %v473
  %v580 = vadd.f32 %v99, %v478
  %v581 = vadd.f32 %v100, %v481
  %v582 = vadd.f32 %v101, %v486
  %v583 = vadd.f32 %v102, %v489
  %v584 = vadd.f32 %v103, %v494
  %v585 = vadd.f32 %v104, %v497
  %v586 = vadd.f32 %v105, %v502
  %v587 = vadd.f32 %v106, %v505
  %v588 = vadd.f32 %v107, %v510
  %v589 = vadd.f32 %v108, %v513
  %v590 = vadd.f32 %v109, %v518
  %v591 = vadd.f32 %v110, %v521
  %v592 = vadd.f32 %v111, %v526
  %v593 = vadd.f32 %v112, %v529
  %v594 = vadd.f32 %v113, %v534
  %v595 = vadd.f32 %v114, %v537
  %v596 = vadd.f32 %v115, %v542
  %v597 = vadd.f32 %v116, %v545
  %v598 = vadd.f32 %v117, %v550
  %v599 = vadd.f32 %v118, %v553
  %v600 = vadd.f32 %v119, %v558
  %v601 = vadd.f32 %v120, %v561
  %v602 = vadd.f32 %v121, %v566
  %v603 = vadd.f32 %v122, %v569
  %604 = vst [vmem:[#allocation2] sm:$0xff] %v572
  %605 = vst [vmem:[#allocation2 + $0x8] sm:$0xff] %v573
  %606 = vst [vmem:[#allocation2 + $0x10] sm:$0xff] %v574
  %607 = vst [vmem:[#allocation2 + $0x18] sm:$0xff] %v575
  %608 = vst [vmem:[#allocation2 + $0x20] sm:$0xff] %v576
  %609 = vst [vmem:[#allocation2 + $0x28] sm:$0xff] %v577
  %610 = vst [vmem:[#allocation2 + $0x30] sm:$0xff] %v578
  %611 = vst [vmem:[#allocation2 + $0x38] sm:$0xff] %v579
  %612 = vst [vmem:[#allocation2 + $0x40] sm:$0xff] %v580
  %613 = vst [vmem:[#allocation2 + $0x48] sm:$0xff] %v581
  %614 = vst [vmem:[#allocation2 + $0x50] sm:$0xff] %v582
  %615 = vst [vmem:[#allocation2 + $0x58] sm:$0xff] %v583
  %616 = vst [vmem:[#allocation2 + $0x60] sm:$0xff] %v584
  %617 = vst [vmem:[#allocation2 + $0x68] sm:$0xff] %v585
  %618 = vst [vmem:[#allocation2 + $0x70] sm:$0xff] %v586
  %619 = vst [vmem:[#allocation2 + $0x78] sm:$0xff] %v587
  %620 = vst [vmem:[#allocation2 + $0x80] sm:$0xff] %v588
  %621 = vst [vmem:[#allocation2 + $0x88] sm:$0xff] %v589
  %622 = vst [vmem:[#allocation2 + $0x90] sm:$0xff] %v590
  %623 = vst [vmem:[#allocation2 + $0x98] sm:$0xff] %v591
  %624 = vst [vmem:[#allocation2 + $0xa0] sm:$0xff] %v592
  %625 = vst [vmem:[#allocation2 + $0xa8] sm:$0xff] %v593
  %626 = vst [vmem:[#allocation2 + $0xb0] sm:$0xff] %v594
  %627 = vst [vmem:[#allocation2 + $0xb8] sm:$0xff] %v595
  %628 = vst [vmem:[#allocation2 + $0xc0] sm:$0xff] %v596
  %629 = vst [vmem:[#allocation2 + $0xc8] sm:$0xff] %v597
  %630 = vst [vmem:[#allocation2 + $0xd0] sm:$0xff] %v598
  %631 = vst [vmem:[#allocation2 + $0xd8] sm:$0xff] %v599
  %632 = vst [vmem:[#allocation2 + $0xe0] sm:$0xff] %v600
  %633 = vst [vmem:[#allocation2 + $0xe8] sm:$0xff] %v601
  %634 = vst [vmem:[#allocation2 + $0xf0] sm:$0xff] %v602
  %635 = vst [vmem:[#allocation2 + $0xf8] sm:$0xff] %v603
  // Predicated region
  $region22: #{graph_feature_encoder.5} parent=0 // pred_check
    %p636 = pneg %p18
  $region23: #{graph_feature_encoder.5} parent=0 // pred_check_branch
    %638 = sbr.rel (%p636) target = $region25
  $region24: #{graph_feature_encoder.5} parent=0 // pred_region
    %v639 = vld [vmem:[#allocation2] sm:$0xff]
    %v640 = vld [vmem:[#allocation2 + $0x8] sm:$0xff]
    %v641 = vld [vmem:[#allocation2 + $0x10] sm:$0xff]
    %v642 = vld [vmem:[#allocation2 + $0x18] sm:$0xff]
    %v643 = vld [vmem:[#allocation2 + $0x20] sm:$0xff]
    %v644 = vld [vmem:[#allocation2 + $0x28] sm:$0xff]
    %v645 = vld [vmem:[#allocation2 + $0x30] sm:$0xff]
    %v646 = vld [vmem:[#allocation2 + $0x38] sm:$0xff]
    %v647 = vld [vmem:[#allocation2 + $0x40] sm:$0xff]
    %v648 = vld [vmem:[#allocation2 + $0x48] sm:$0xff]
    %v649 = vld [vmem:[#allocation2 + $0x50] sm:$0xff]
    %v650 = vld [vmem:[#allocation2 + $0x58] sm:$0xff]
    %v651 = vld [vmem:[#allocation2 + $0x60] sm:$0xff]
    %v652 = vld [vmem:[#allocation2 + $0x68] sm:$0xff]
    %v653 = vld [vmem:[#allocation2 + $0x70] sm:$0xff]
    %v654 = vld [vmem:[#allocation2 + $0x78] sm:$0xff]
    %v655 = vld [vmem:[#allocation2 + $0x80] sm:$0xff]
    %v656 = vld [vmem:[#allocation2 + $0x88] sm:$0xff]
    %v657 = vld [vmem:[#allocation2 + $0x90] sm:$0xff]
    %v658 = vld [vmem:[#allocation2 + $0x98] sm:$0xff]
    %v659 = vld [vmem:[#allocation2 + $0xa0] sm:$0xff]
    %v660 = vld [vmem:[#allocation2 + $0xa8] sm:$0xff]
    %v661 = vld [vmem:[#allocation2 + $0xb0] sm:$0xff]
    %v662 = vld [vmem:[#allocation2 + $0xb8] sm:$0xff]
    %v663 = vld [vmem:[#allocation2 + $0xc0] sm:$0xff]
    %v664 = vld [vmem:[#allocation2 + $0xc8] sm:$0xff]
    %v665 = vld [vmem:[#allocation2 + $0xd0] sm:$0xff]
    %v666 = vld [vmem:[#allocation2 + $0xd8] sm:$0xff]
    %v667 = vld [vmem:[#allocation2 + $0xe0] sm:$0xff]
    %v668 = vld [vmem:[#allocation2 + $0xe8] sm:$0xff]
    %v669 = vld [vmem:[#allocation2 + $0xf0] sm:$0xff]
    %v670 = vld [vmem:[#allocation2 + $0xf8] sm:$0xff]
    %v671 = vld [vmem:[%s2] sm:$0x1]
    %v673 = vlaneseq
    %v674 = vshrl.u32 %v673, 7
    %v675 = vsub.s32 0, %v674
    %v676 = vrot.slane %v671, %v675
    %v678 = vmul.f32 %v639, %v676
    %v679 = vmul.f32 %v640, %v676
    %v680 = vmul.f32 %v641, %v676
    %v681 = vmul.f32 %v642, %v676
    %v682 = vmul.f32 %v643, %v676
    %v683 = vmul.f32 %v644, %v676
    %v684 = vmul.f32 %v645, %v676
    %v685 = vmul.f32 %v646, %v676
    %v686 = vmul.f32 %v647, %v676
    %v687 = vmul.f32 %v648, %v676
    %v688 = vmul.f32 %v649, %v676
    %v689 = vmul.f32 %v650, %v676
    %v690 = vmul.f32 %v651, %v676
    %v691 = vmul.f32 %v652, %v676
    %v692 = vmul.f32 %v653, %v676
    %v693 = vmul.f32 %v654, %v676
    %v694 = vmul.f32 %v655, %v676
    %v695 = vmul.f32 %v656, %v676
    %v696 = vmul.f32 %v657, %v676
    %v697 = vmul.f32 %v658, %v676
    %v698 = vmul.f32 %v659, %v676
    %v699 = vmul.f32 %v660, %v676
    %v700 = vmul.f32 %v661, %v676
    %v701 = vmul.f32 %v662, %v676
    %v702 = vmul.f32 %v663, %v676
    %v703 = vmul.f32 %v664, %v676
    %v704 = vmul.f32 %v665, %v676
    %v705 = vmul.f32 %v666, %v676
    %v706 = vmul.f32 %v667, %v676
    %v707 = vmul.f32 %v668, %v676
    %v708 = vmul.f32 %v669, %v676
    %v709 = vmul.f32 %v670, %v676
    %v710 = vld [vmem:[%s3] sm:$0x1]
    %v712 = vlaneseq
    %v713 = vshrl.u32 %v712, 7
    %v714 = vsub.s32 0, %v713
    %v715 = vrot.slane %v710, %v714
    %v717 = vadd.f32 %v678, %v715
    %v718 = vadd.f32 %v679, %v715
    %v719 = vadd.f32 %v680, %v715
    %v720 = vadd.f32 %v681, %v715
    %v721 = vadd.f32 %v682, %v715
    %v722 = vadd.f32 %v683, %v715
    %v723 = vadd.f32 %v684, %v715
    %v724 = vadd.f32 %v685, %v715
    %v725 = vadd.f32 %v686, %v715
    %v726 = vadd.f32 %v687, %v715
    %v727 = vadd.f32 %v688, %v715
    %v728 = vadd.f32 %v689, %v715
    %v729 = vadd.f32 %v690, %v715
    %v730 = vadd.f32 %v691, %v715
    %v731 = vadd.f32 %v692, %v715
    %v732 = vadd.f32 %v693, %v715
    %v733 = vadd.f32 %v694, %v715
    %v734 = vadd.f32 %v695, %v715
    %v735 = vadd.f32 %v696, %v715
    %v736 = vadd.f32 %v697, %v715
    %v737 = vadd.f32 %v698, %v715
    %v738 = vadd.f32 %v699, %v715
    %v739 = vadd.f32 %v700, %v715
    %v740 = vadd.f32 %v701, %v715
    %v741 = vadd.f32 %v702, %v715
    %v742 = vadd.f32 %v703, %v715
    %v743 = vadd.f32 %v704, %v715
    %v744 = vadd.f32 %v705, %v715
    %v745 = vadd.f32 %v706, %v715
    %v746 = vadd.f32 %v707, %v715
    %v747 = vadd.f32 %v708, %v715
    %v748 = vadd.f32 %v709, %v715
    %749 = vst [vmem:[%s4] sm:$0xff] %v717
    %750 = vst [vmem:[%s4 + $0x8] sm:$0xff] %v718
    %751 = vst [vmem:[%s4 + $0x10] sm:$0xff] %v719
    %752 = vst [vmem:[%s4 + $0x18] sm:$0xff] %v720
    %753 = vst [vmem:[%s4 + $0x20] sm:$0xff] %v721
    %754 = vst [vmem:[%s4 + $0x28] sm:$0xff] %v722
    %755 = vst [vmem:[%s4 + $0x30] sm:$0xff] %v723
    %756 = vst [vmem:[%s4 + $0x38] sm:$0xff] %v724
    %757 = vst [vmem:[%s4 + $0x40] sm:$0xff] %v725
    %758 = vst [vmem:[%s4 + $0x48] sm:$0xff] %v726
    %759 = vst [vmem:[%s4 + $0x50] sm:$0xff] %v727
    %760 = vst [vmem:[%s4 + $0x58] sm:$0xff] %v728
    %761 = vst [vmem:[%s4 + $0x60] sm:$0xff] %v729
    %762 = vst [vmem:[%s4 + $0x68] sm:$0xff] %v730
    %763 = vst [vmem:[%s4 + $0x70] sm:$0xff] %v731
    %764 = vst [vmem:[%s4 + $0x78] sm:$0xff] %v732
    %765 = vst [vmem:[%s4 + $0x80] sm:$0xff] %v733
    %766 = vst [vmem:[%s4 + $0x88] sm:$0xff] %v734
    %767 = vst [vmem:[%s4 + $0x90] sm:$0xff] %v735
    %768 = vst [vmem:[%s4 + $0x98] sm:$0xff] %v736
    %769 = vst [vmem:[%s4 + $0xa0] sm:$0xff] %v737
    %770 = vst [vmem:[%s4 + $0xa8] sm:$0xff] %v738
    %771 = vst [vmem:[%s4 + $0xb0] sm:$0xff] %v739
    %772 = vst [vmem:[%s4 + $0xb8] sm:$0xff] %v740
    %773 = vst [vmem:[%s4 + $0xc0] sm:$0xff] %v741
    %774 = vst [vmem:[%s4 + $0xc8] sm:$0xff] %v742
    %775 = vst [vmem:[%s4 + $0xd0] sm:$0xff] %v743
    %776 = vst [vmem:[%s4 + $0xd8] sm:$0xff] %v744
    %777 = vst [vmem:[%s4 + $0xe0] sm:$0xff] %v745
    %778 = vst [vmem:[%s4 + $0xe8] sm:$0xff] %v746
    %779 = vst [vmem:[%s4 + $0xf0] sm:$0xff] %v747
    %780 = vst [vmem:[%s4 + $0xf8] sm:$0xff] %v748
  $region25: #{graph_feature_encoder.5} parent=0 // pred_fallthru
    _
  // Predicated region
  $region26: #{graph_feature_encoder.5} parent=0 // pred_check
    _
  $region27: #{graph_feature_encoder.5} parent=0 // pred_check_branch
    %782 = sbr.rel (0) target = $region29
  $region28: #{graph_feature_encoder.5} parent=0 // pred_region
    _
  $region29: #{graph_feature_encoder.5} parent=0 // pred_fallthru
    _
  // Predicated region
  $region30: #{graph_feature_encoder.5} parent=0 // pred_check
    _
  $region31: #{graph_feature_encoder.5} parent=0 // pred_check_branch
    %784 = sbr.rel (0) target = $region33
  $region32: #{graph_feature_encoder.5} parent=0 // pred_region
    _
  $region33: #{graph_feature_encoder.5} parent=0 // pred_fallthru
    _

</llo_original>
